<compile_context>
chip_gen: v6e
topology: v6e:2x2x1
jax: 0.10.0
libtpu: 0.0.40
codegen_flags: <defaults>
</compile_context>

<pallas_src>
import functools

import jax
import jax.numpy as jnp
from jax.experimental import pallas as pl
from jax.experimental.pallas import tpu as pltpu

IN_DIM = 784
HID_DIM = 100
OUT_DIM = 10
HID_PAD = 128          # lane-pad 100 -> 128
OUT_PAD = 128          # lane-pad 10  -> 128 (lane-dense output slab; sliced in the wrapper)
EPS = 1e-5
MOMENTUM = 0.1         # moving = 0.1*old + 0.9*batch  (matches the custom batch_norm_1d)

# packed parameter-slab rows (single (8,128) input DMA)
ROW_B1, ROW_GAMMA, ROW_BETA, ROW_MOV_MEAN, ROW_MOV_VAR, ROW_B2 = 0, 1, 2, 3, 4, 5
# packed stats-slab rows (single (8,128) output)
ROW_MEAN, ROW_VAR, ROW_NEW_MEAN, ROW_NEW_VAR = 0, 1, 2, 3
# accumulator-scratch rows (fused kernel)
ACC_SUM, ACC_SUMSQ, ACC_MEAN, ACC_VAR = 0, 1, 2, 3

# Max bytes of the VMEM-resident hidden-activation slab for the fused single-kernel path.
# Beyond this we fall back to the two-pass (HBM round-trip) pipeline.
_FUSED_H_VMEM_BUDGET = 12 * 1024 * 1024


def _round_up(n, m):
    return ((n + m - 1) // m) * m


# ---------------------------------------------------------------------------
# Fused single-kernel path: grid = (phase, batch_tile)
# ---------------------------------------------------------------------------
def _fused_kernel(x_ref, w1_ref, pslab_ref, w2_ref, out_ref, stats_ref,
                  h_vmem, acc_ref, *, batch, tile_b):
    phase = pl.program_id(0)
    tid = pl.program_id(1)
    ntiles = pl.num_programs(1)

    @pl.when(jnp.logical_and(phase == 0, tid == 0))
    def _():
        acc_ref[...] = jnp.zeros_like(acc_ref)

    @pl.when(phase == 0)
    def _():
        # layer1 on the MXU: bf16 operands, f32 accumulation; BN math stays in f32.
        h = jnp.dot(x_ref[...].astype(jnp.bfloat16), w1_ref[...],
                    preferred_element_type=jnp.float32)
        h = h + pslab_ref[ROW_B1:ROW_B1 + 1, :]
        h_vmem[tid] = h                      # park tile in VMEM (no HBM round trip)

        # Mask zero-padded batch rows out of the statistics (batch/tile_b are trace-time ints).
        row = jax.lax.broadcasted_iota(jnp.int32, (tile_b, 1), 0) + tid * tile_b
        hm = jnp.where(row < batch, h, 0.0)
        acc_ref[ACC_SUM:ACC_SUM + 1, :] += jnp.sum(hm, axis=0, keepdims=True)
        acc_ref[ACC_SUMSQ:ACC_SUMSQ + 1, :] += jnp.sum(hm * hm, axis=0, keepdims=True)

    @pl.when(jnp.logical_and(phase == 0, tid == ntiles - 1))
    def _():
        inv_b = jnp.float32(1.0 / batch)
        mean = acc_ref[ACC_SUM:ACC_SUM + 1, :] * inv_b
        var = jnp.maximum(acc_ref[ACC_SUMSQ:ACC_SUMSQ + 1, :] * inv_b - mean * mean,
                          0.0)                                  # biased var, as reference
        # keep finalized stats in scratch for phase 1 ...
        acc_ref[ACC_MEAN:ACC_MEAN + 1, :] = mean
        acc_ref[ACC_VAR:ACC_VAR + 1, :] = var
        # ... and emit the stats slab output (batch stats + moving-stat update).
        stats_ref[...] = jnp.zeros_like(stats_ref)
        stats_ref[ROW_MEAN:ROW_MEAN + 1, :] = mean
        stats_ref[ROW_VAR:ROW_VAR + 1, :] = var
        stats_ref[ROW_NEW_MEAN:ROW_NEW_MEAN + 1, :] = (
            MOMENTUM * pslab_ref[ROW_MOV_MEAN:ROW_MOV_MEAN + 1, :] + (1.0 - MOMENTUM) * mean)
        stats_ref[ROW_NEW_VAR:ROW_NEW_VAR + 1, :] = (
            MOMENTUM * pslab_ref[ROW_MOV_VAR:ROW_MOV_VAR + 1, :] + (1.0 - MOMENTUM) * var)

    @pl.when(phase == 1)
    def _():
        h = h_vmem[tid]
        mean = acc_ref[ACC_MEAN:ACC_MEAN + 1, :]
        var = acc_ref[ACC_VAR:ACC_VAR + 1, :]
        gamma = pslab_ref[ROW_GAMMA:ROW_GAMMA + 1, :]
        beta = pslab_ref[ROW_BETA:ROW_BETA + 1, :]
        b2 = pslab_ref[ROW_B2:ROW_B2 + 1, :]          # HID_PAD == OUT_PAD, so widths match

        x_hat = (h - mean) * jax.lax.rsqrt(var + EPS)  # rsqrt -> EUP slot (free vs sqrt+div)
        a = jnp.maximum(gamma * x_hat + beta, 0.0)     # affine + ReLU in f32
        out_ref[...] = jnp.dot(a.astype(jnp.bfloat16), w2_ref[...],
                               preferred_element_type=jnp.float32) + b2


# ---------------------------------------------------------------------------
# Fallback two-pass path (hidden slab too big for VMEM): identical to the
# previously validated version.
# ---------------------------------------------------------------------------
def _stats_kernel(x_ref, w1_ref, pslab_ref, h_ref, stats_ref, acc_ref, *, batch, tile_b):
    """Pass 1: layer1 GEMM + cross-tile accumulation of per-feature sum / sum-of-squares."""
    pid = pl.program_id(0)
    nprog = pl.num_programs(0)

    @pl.when(pid == 0)
    def _():
        acc_ref[...] = jnp.zeros_like(acc_ref)

    x = x_ref[...]
    h = jnp.dot(x.astype(jnp.bfloat16), w1_ref[...],
                preferred_element_type=jnp.float32)
    h = h + pslab_ref[ROW_B1:ROW_B1 + 1, :]
    h_ref[...] = h

    row = jax.lax.broadcasted_iota(jnp.int32, (tile_b, 1), 0) + pid * tile_b
    hm = jnp.where(row < batch, h, 0.0)
    acc_ref[0:1, :] += jnp.sum(hm, axis=0, keepdims=True)
    acc_ref[1:2, :] += jnp.sum(hm * hm, axis=0, keepdims=True)

    @pl.when(pid == nprog - 1)
    def _():
        inv_b = jnp.float32(1.0 / batch)
        mean = acc_ref[0:1, :] * inv_b
        var = jnp.maximum(acc_ref[1:2, :] * inv_b - mean * mean, 0.0)
        stats_ref[...] = jnp.zeros_like(stats_ref)
        stats_ref[ROW_MEAN:ROW_MEAN + 1, :] = mean
        stats_ref[ROW_VAR:ROW_VAR + 1, :] = var
        stats_ref[ROW_NEW_MEAN:ROW_NEW_MEAN + 1, :] = (
            MOMENTUM * pslab_ref[ROW_MOV_MEAN:ROW_MOV_MEAN + 1, :] + (1.0 - MOMENTUM) * mean)
        stats_ref[ROW_NEW_VAR:ROW_NEW_VAR + 1, :] = (
            MOMENTUM * pslab_ref[ROW_MOV_VAR:ROW_MOV_VAR + 1, :] + (1.0 - MOMENTUM) * var)


def _head_kernel(h_ref, stats_ref, pslab_ref, w2_ref, out_ref):
    """Pass 2: normalize + affine + ReLU + layer2 GEMM (independent per batch tile)."""
    h = h_ref[...]
    mean = stats_ref[ROW_MEAN:ROW_MEAN + 1, :]
    var = stats_ref[ROW_VAR:ROW_VAR + 1, :]
    gamma = pslab_ref[ROW_GAMMA:ROW_GAMMA + 1, :]
    beta = pslab_ref[ROW_BETA:ROW_BETA + 1, :]
    b2 = pslab_ref[ROW_B2:ROW_B2 + 1, :]

    x_hat = (h - mean) * jax.lax.rsqrt(var + EPS)
    a = jnp.maximum(gamma * x_hat + beta, 0.0)
    out_ref[...] = jnp.dot(a.astype(jnp.bfloat16), w2_ref[...],
                           preferred_element_type=jnp.float32) + b2


# ---------------------------------------------------------------------------
# Wrapper
# ---------------------------------------------------------------------------
def multi_network_forward(x, params, *, tile_b=512, force_two_pass=False):
    """x: [B, 784] float32.

    Returns (logits [B, 10], new_moving_mean [100], new_moving_var [100]), matching the
    PyTorch module in training mode (is_train=True) including the moving-stat side effect.
    """
    batch = x.shape[0]
    tile = min(tile_b, _round_up(batch, 8))        # cap keeps double-buffered x well under
    tile = max(8, _round_up(tile, 8))              # v7x's 32 MiB scoped / 64 MiB physical VMEM
    b_pad = _round_up(batch, tile)
    num_tiles = b_pad // tile

    x_pad = jnp.zeros((b_pad, IN_DIM), jnp.float32).at[:batch].set(x.astype(jnp.float32))

    # Lane-pad weights; bf16 operands for the MXU (f32 accumulation happens in-kernel).
    w1p = jnp.zeros((IN_DIM, HID_PAD), jnp.float32).at[:, :HID_DIM].set(params["w1"])
    w1p = w1p.astype(jnp.bfloat16)
    w2p = jnp.zeros((HID_PAD, OUT_PAD), jnp.float32).at[:HID_DIM, :OUT_DIM].set(params["w2"])
    w2p = w2p.astype(jnp.bfloat16)

    # Pack the six small parameter vectors into a single (8, 128) slab -> one DMA.
    pslab = jnp.zeros((8, HID_PAD), jnp.float32)
    pslab = pslab.at[ROW_B1, :HID_DIM].set(params["b1"])
    pslab = pslab.at[ROW_GAMMA, :HID_DIM].set(params["gamma"])
    pslab = pslab.at[ROW_BETA, :HID_DIM].set(params["beta"])
    pslab = pslab.at[ROW_MOV_MEAN, :HID_DIM].set(params["moving_mean"])
    pslab = pslab.at[ROW_MOV_VAR, :HID_DIM].set(params["moving_var"])
    pslab = pslab.at[ROW_B2, :OUT_DIM].set(params["b2"])

    h_bytes = b_pad * HID_PAD * 4
    use_fused = (not force_two_pass) and (h_bytes <= _FUSED_H_VMEM_BUDGET)

    if use_fused:
        # -------- fused single kernel: grid = (phase, tile) --------
        cost = pl.CostEstimate(
            flops=(2 * b_pad * IN_DIM * HID_PAD + 2 * b_pad * HID_PAD * OUT_PAD
                   + 10 * b_pad * HID_PAD),
            transcendentals=num_tiles * HID_PAD,
            bytes_accessed=(b_pad * IN_DIM * 4 + IN_DIM * HID_PAD * 2
                            + HID_PAD * OUT_PAD * 2 + 8 * HID_PAD * 4
                            + b_pad * OUT_PAD * 4 + 8 * HID_PAD * 4),
        )
        logits_pad, stats = pl.pallas_call(
            functools.partial(_fused_kernel, batch=batch, tile_b=tile),
            out_shape=(
                jax.ShapeDtypeStruct((b_pad, OUT_PAD), jnp.float32),
                jax.ShapeDtypeStruct((8, HID_PAD), jnp.float32),
            ),
            grid=(2, num_tiles),
            in_specs=[
                # x: tile i in phase 0; held at the last block in phase 1 -> no re-DMA.
                pl.BlockSpec((tile, IN_DIM),
                             lambda p, i: (i * (1 - p) + (num_tiles - 1) * p, 0)),
                pl.BlockSpec((IN_DIM, HID_PAD), lambda p, i: (0, 0)),   # W1 resident
                pl.BlockSpec((8, HID_PAD), lambda p, i: (0, 0)),        # param slab resident
                pl.BlockSpec((HID_PAD, OUT_PAD), lambda p, i: (0, 0)),  # W2 resident
            ],
            out_specs=(
                # logits: held at block 0 during phase 0 (never flushed with garbage),
                # revisited and filled tile-by-tile in phase 1.
                pl.BlockSpec((tile, OUT_PAD), lambda p, i: (i * p, 0)),
                pl.BlockSpec((8, HID_PAD), lambda p, i: (0, 0)),        # stats slab
            ),
            scratch_shapes=[
                pltpu.VMEM((num_tiles, tile, HID_PAD), jnp.float32),    # resident hidden slab
                pltpu.VMEM((8, HID_PAD), jnp.float32),                  # stat accumulator
            ],
            compiler_params=pltpu.CompilerParams(
                dimension_semantics=("arbitrary", "arbitrary"),
                vmem_limit_bytes=32 * 1024 * 1024,
            ),
            cost_estimate=cost,
        )(x_pad, w1p, pslab, w2p)
    else:
        # -------- fallback: two-pass pipeline with HBM hidden intermediate --------
        cost1 = pl.CostEstimate(
            flops=2 * b_pad * IN_DIM * HID_PAD + 4 * b_pad * HID_PAD,
            transcendentals=0,
            bytes_accessed=(b_pad * IN_DIM * 4 + IN_DIM * HID_PAD * 2
                            + b_pad * HID_PAD * 4 + 2 * 8 * HID_PAD * 4),
        )
        const = lambda shape: pl.BlockSpec(shape, lambda i: (0, 0))
        tiled = lambda shape: pl.BlockSpec(shape, lambda i: (i, 0))
        h_pad, stats = pl.pallas_call(
            functools.partial(_stats_kernel, batch=batch, tile_b=tile),
            out_shape=(
                jax.ShapeDtypeStruct((b_pad, HID_PAD), jnp.float32),
                jax.ShapeDtypeStruct((8, HID_PAD), jnp.float32),
            ),
            grid=(num_tiles,),
            in_specs=[
                tiled((tile, IN_DIM)),
                const((IN_DIM, HID_PAD)),
                const((8, HID_PAD)),
            ],
            out_specs=(
                tiled((tile, HID_PAD)),
                const((8, HID_PAD)),
            ),
            scratch_shapes=[pltpu.VMEM((2, HID_PAD), jnp.float32)],
            compiler_params=pltpu.CompilerParams(
                dimension_semantics=("arbitrary",),
                vmem_limit_bytes=32 * 1024 * 1024,
            ),
            cost_estimate=cost1,
        )(x_pad, w1p, pslab)

        cost2 = pl.CostEstimate(
            flops=2 * b_pad * HID_PAD * OUT_PAD + 6 * b_pad * HID_PAD,
            transcendentals=num_tiles * HID_PAD,
            bytes_accessed=(b_pad * HID_PAD * 4 + HID_PAD * OUT_PAD * 2
                            + b_pad * OUT_PAD * 4 + 2 * 8 * HID_PAD * 4),
        )
        logits_pad = pl.pallas_call(
            _head_kernel,
            out_shape=jax.ShapeDtypeStruct((b_pad, OUT_PAD), jnp.float32),
            grid=(num_tiles,),
            in_specs=[
                tiled((tile, HID_PAD)),
                const((8, HID_PAD)),
                const((8, HID_PAD)),
                const((HID_PAD, OUT_PAD)),
            ],
            out_specs=tiled((tile, OUT_PAD)),
            compiler_params=pltpu.CompilerParams(
                dimension_semantics=("parallel",),   # shards batch tiles across v7x's 2 TCs
                vmem_limit_bytes=32 * 1024 * 1024,
            ),
            cost_estimate=cost2,
        )(h_pad, stats, pslab, w2p)

    logits = logits_pad[:batch, :OUT_DIM]
    new_moving_mean = stats[ROW_NEW_MEAN, :HID_DIM]
    new_moving_var = stats[ROW_NEW_VAR, :HID_DIM]
    return logits, new_moving_mean, new_moving_var


def init_params(key):
    """Deterministic init mimicking nn.Linear (uniform +-1/sqrt(fan_in)) and randn gamma/beta."""
    k1, k2, k3, k4, k5, k6 = jax.random.split(key, 6)
    bound1 = 1.0 / jnp.sqrt(jnp.float32(IN_DIM))
    bound2 = 1.0 / jnp.sqrt(jnp.float32(HID_DIM))
    return {
        "w1": jax.random.uniform(k1, (IN_DIM, HID_DIM), jnp.float32, -bound1, bound1),
        "b1": jax.random.uniform(k2, (HID_DIM,), jnp.float32, -bound1, bound1),
        "gamma": jax.random.normal(k3, (HID_DIM,), jnp.float32),
        "beta": jax.random.normal(k4, (HID_DIM,), jnp.float32),
        "moving_mean": jnp.zeros((HID_DIM,), jnp.float32),
        "moving_var": jnp.zeros((HID_DIM,), jnp.float32),
        "w2": jax.random.uniform(k5, (HID_DIM, OUT_DIM), jnp.float32, -bound2, bound2),
        "b2": jax.random.uniform(k6, (OUT_DIM,), jnp.float32, -bound2, bound2),
    }


def reference_forward(x, params, matmul_dtype=jnp.float32):
    """Plain-JAX reference of the PyTorch forward (training mode) + moving-stat update."""
    cast = lambda a: a.astype(matmul_dtype)
    h = jnp.dot(cast(x), cast(params["w1"]), preferred_element_type=jnp.float32) + params["b1"]
    m = jnp.mean(h, axis=0, keepdims=True)
    v = jnp.mean((h - m) ** 2, axis=0, keepdims=True)
    hn = params["gamma"] * ((h - m) / jnp.sqrt(v + EPS)) + params["beta"]
    hn = jnp.maximum(hn, 0.0)
    logits = jnp.dot(cast(hn), cast(params["w2"]),
                     preferred_element_type=jnp.float32) + params["b2"]
    new_mm = MOMENTUM * params["moving_mean"] + (1.0 - MOMENTUM) * m[0]
    new_mv = MOMENTUM * params["moving_var"] + (1.0 - MOMENTUM) * v[0]
    return logits, new_mm, new_mv


if __name__ == "__main__":
    key = jax.random.PRNGKey(0)
    pkey, xkey = jax.random.split(key)
    params = init_params(pkey)

    def check(batch, tile_b, force_two_pass=False):
        xk = jax.random.fold_in(xkey, batch)
        x = jax.random.normal(xk, (batch, IN_DIM), jnp.float32)

        logits, new_mm, new_mv = multi_network_forward(
            x, params, tile_b=tile_b, force_two_pass=force_two_pass)
        jax.block_until_ready((logits, new_mm, new_mv))
        assert logits.shape == (batch, OUT_DIM)
        assert new_mm.shape == (HID_DIM,) and new_mv.shape == (HID_DIM,)

        # Tight check vs a reference matching the kernel's bf16-MXU / f32-accum numerics.
        ref_l, ref_mm, ref_mv = reference_forward(x, params, matmul_dtype=jnp.bfloat16)
        assert jnp.allclose(logits, ref_l, atol=1e-2, rtol=1e-2), "logits mismatch (bf16 ref)"
        assert jnp.allclose(new_mm, ref_mm, atol=1e-3, rtol=1e-3), "moving_mean mismatch"
        assert jnp.allclose(new_mv, ref_mv, atol=1e-3, rtol=1e-3), "moving_var mismatch"

        # Loose sanity check vs the pure-f32 reference (only bf16 matmul drift expected).
        f32_l, _, _ = reference_forward(x, params, matmul_dtype=jnp.float32)
        assert jnp.allclose(logits, f32_l, atol=1e-1, rtol=1e-1), "logits mismatch (f32 ref)"

    check(batch=8, tile_b=512)                          # fused path, single-tile
    check(batch=300, tile_b=128)                        # fused path, multi-tile + batch padding
    check(batch=300, tile_b=128, force_two_pass=True)   # fallback two-pass path

    print("KERNEL_OK")
</pallas_src>

<mosaic_0001>
module attributes {stable_mosaic.version = 11 : i64} {
  func.func @_fused_kernel(%arg0: i32, %arg1: i32, %arg2: memref<8x784xf32, #tpu.memory_space<vmem>>, %arg3: memref<784x128xbf16, #tpu.memory_space<vmem>>, %arg4: memref<8x128xf32, #tpu.memory_space<vmem>>, %arg5: memref<128x128xbf16, #tpu.memory_space<vmem>>, %arg6: memref<8x128xf32, #tpu.memory_space<vmem>>, %arg7: memref<8x128xf32, #tpu.memory_space<vmem>>, %arg8: memref<1x8x128xf32, #tpu.memory_space<vmem>>, %arg9: memref<8x128xf32, #tpu.memory_space<vmem>>) attributes {dimension_semantics = [#tpu.dimension_semantics<arbitrary>, #tpu.dimension_semantics<arbitrary>], iteration_bounds = array<i64: 2, 1>, scalar_prefetch = 0 : i64, scratch_operands = 2 : i64, tpu.core_type = #tpu.core_type<tc>, window_params = [{transform_indices = @transform_0, window_bounds = array<i64: 8, 784>}, {pipeline_mode = #tpu.pipeline_mode<synchronous>, transform_indices = @transform_1, window_bounds = array<i64: 784, 128>}, {pipeline_mode = #tpu.pipeline_mode<synchronous>, transform_indices = @transform_2, window_bounds = array<i64: 8, 128>}, {pipeline_mode = #tpu.pipeline_mode<synchronous>, transform_indices = @transform_3, window_bounds = array<i64: 128, 128>}, {transform_indices = @transform_4, window_bounds = array<i64: 8, 128>}, {pipeline_mode = #tpu.pipeline_mode<synchronous>, transform_indices = @transform_5, window_bounds = array<i64: 8, 128>}]} {
    %c0_i32 = arith.constant 0 : i32
    %0 = arith.cmpi eq, %arg0, %c0_i32 : i32
    %c0_i32_0 = arith.constant 0 : i32
    %1 = arith.cmpi eq, %arg1, %c0_i32_0 : i32
    %2 = arith.andi %0, %1 : i1
    %3 = arith.extui %2 : i1 to i32
    %c0_i32_1 = arith.constant 0 : i32
    %4 = arith.cmpi ne, %3, %c0_i32_1 : i32
    scf.if %4 {
      %cst = arith.constant 0.000000e+00 : f32
      %16 = vector.broadcast %cst : f32 to vector<8x128xf32>
      %c0 = arith.constant 0 : index
      %c0_8 = arith.constant 0 : index
      %17 = vector.load %arg9[%c0, %c0_8] : memref<8x128xf32, #tpu.memory_space<vmem>>, vector<8x128xf32>
      tpu.vector_store %arg9[%c0, %c0_8], %16 {strides = array<i32>} : memref<8x128xf32, #tpu.memory_space<vmem>>, vector<8x128xf32>,
    } else {
    }
    %c0_i32_2 = arith.constant 0 : i32
    %5 = arith.cmpi eq, %arg0, %c0_i32_2 : i32
    %6 = arith.extui %5 : i1 to i32
    %c0_i32_3 = arith.constant 0 : i32
    %7 = arith.cmpi ne, %6, %c0_i32_3 : i32
    scf.if %7 {
      %c0 = arith.constant 0 : index
      %c0_8 = arith.constant 0 : index
      %16 = vector.load %arg2[%c0, %c0_8] : memref<8x784xf32, #tpu.memory_space<vmem>>, vector<8x784xf32>
      %17 = arith.truncf %16 : vector<8x784xf32> to vector<8x784xbf16>
      %c0_9 = arith.constant 0 : index
      %c0_10 = arith.constant 0 : index
      %18 = vector.load %arg3[%c0_9, %c0_10] : memref<784x128xbf16, #tpu.memory_space<vmem>>, vector<784x128xbf16>
      %cst = arith.constant dense<0.000000e+00> : vector<8x128xf32>
      %19 = tpu.matmul %17, %18, %cst {dimension_numbers = #tpu.dot_dimension_numbers<[1], [0], [0], [1], [0, 0, 1, 1], [], []>} : vector<8x784xbf16>, vector<784x128xbf16>, vector<8x128xf32> -> vector<8x128xf32>
      %c0_11 = arith.constant 0 : index
      %c0_12 = arith.constant 0 : index
      %20 = vector.load %arg4[%c0_11, %c0_12] : memref<8x128xf32, #tpu.memory_space<vmem>>, vector<1x128xf32>
      %21 = vector.broadcast %20 : vector<1x128xf32> to vector<8x128xf32>
      %22 = arith.addf %19, %21 : vector<8x128xf32>
      %23 = arith.index_cast %arg1 : i32 to index
      %c0_13 = arith.constant 0 : index
      %c0_14 = arith.constant 0 : index
      %24 = vector.load %arg8[%23, %c0_13, %c0_14] : memref<1x8x128xf32, #tpu.memory_space<vmem>>, vector<1x8x128xf32>
      %25 = vector.shape_cast %24 : vector<1x8x128xf32> to vector<8x128xf32>
      %26 = vector.shape_cast %22 : vector<8x128xf32> to vector<1x8x128xf32>
      tpu.vector_store %arg8[%23, %c0_13, %c0_14], %26 {strides = array<i32>} : memref<1x8x128xf32, #tpu.memory_space<vmem>>, vector<1x8x128xf32>,
      %27 = tpu.iota {dimensions = array<i32: 0>} : vector<8x1xi32>
      %c8_i32 = arith.constant 8 : i32
      %28 = arith.muli %arg1, %c8_i32 : i32
      %29 = vector.broadcast %28 : i32 to vector<8x1xi32>
      %30 = arith.addi %27, %29 : vector<8x1xi32>
      %c8_i32_15 = arith.constant 8 : i32
      %31 = vector.broadcast %c8_i32_15 : i32 to vector<8x1xi32>
      %32 = arith.cmpi slt, %30, %31 : vector<8x1xi32>
      %cst_16 = arith.constant 0.000000e+00 : f32
      %33 = vector.shape_cast %32 : vector<8x1xi1> to vector<8x1xi1>
      %34 = vector.broadcast %33 : vector<8x1xi1> to vector<8x128xi1>
      %35 = vector.broadcast %cst_16 : f32 to vector<8x128xf32>
      %36 = arith.select %34, %22, %35 : vector<8x128xi1>, vector<8x128xf32>
      %c0_17 = arith.constant 0 : index
      %c0_18 = arith.constant 0 : index
      %37 = vector.load %arg9[%c0_17, %c0_18] : memref<8x128xf32, #tpu.memory_space<vmem>>, vector<1x128xf32>
      %cst_19 = arith.constant dense<0.000000e+00> : vector<128xf32>
      %38 = vector.multi_reduction <add>, %36, %cst_19 [0] : vector<8x128xf32> to vector<128xf32>
      %39 = vector.shape_cast %38 : vector<128xf32> to vector<1x128xf32>
      %40 = arith.addf %37, %39 : vector<1x128xf32>
      %c0_20 = arith.constant 0 : index
      %c0_21 = arith.constant 0 : index
      %41 = vector.load %arg9[%c0_20, %c0_21] : memref<8x128xf32, #tpu.memory_space<vmem>>, vector<1x128xf32>
      tpu.vector_store %arg9[%c0_20, %c0_21], %40 {strides = array<i32>} : memref<8x128xf32, #tpu.memory_space<vmem>>, vector<1x128xf32>,
      %c1 = arith.constant 1 : index
      %c0_22 = arith.constant 0 : index
      %42 = vector.load %arg9[%c1, %c0_22] : memref<8x128xf32, #tpu.memory_space<vmem>>, vector<1x128xf32>
      %43 = arith.mulf %36, %36 : vector<8x128xf32>
      %cst_23 = arith.constant dense<0.000000e+00> : vector<128xf32>
      %44 = vector.multi_reduction <add>, %43, %cst_23 [0] : vector<8x128xf32> to vector<128xf32>
      %45 = vector.shape_cast %44 : vector<128xf32> to vector<1x128xf32>
      %46 = arith.addf %42, %45 : vector<1x128xf32>
      %c1_24 = arith.constant 1 : index
      %c0_25 = arith.constant 0 : index
      %47 = vector.load %arg9[%c1_24, %c0_25] : memref<8x128xf32, #tpu.memory_space<vmem>>, vector<1x128xf32>
      tpu.vector_store %arg9[%c1_24, %c0_25], %46 {strides = array<i32>} : memref<8x128xf32, #tpu.memory_space<vmem>>, vector<1x128xf32>,
    } else {
    }
    %c0_i32_4 = arith.constant 0 : i32
    %8 = arith.cmpi eq, %arg0, %c0_i32_4 : i32
    %c0_i32_5 = arith.constant 0 : i32
    %9 = arith.cmpi eq, %arg1, %c0_i32_5 : i32
    %10 = arith.andi %8, %9 : i1
    %11 = arith.extui %10 : i1 to i32
    %c0_i32_6 = arith.constant 0 : i32
    %12 = arith.cmpi ne, %11, %c0_i32_6 : i32
    scf.if %12 {
      %c0 = arith.constant 0 : index
      %c0_8 = arith.constant 0 : index
      %16 = vector.load %arg9[%c0, %c0_8] : memref<8x128xf32, #tpu.memory_space<vmem>>, vector<1x128xf32>
      %cst = arith.constant 1.250000e-01 : f32
      %17 = vector.broadcast %cst : f32 to vector<1x128xf32>
      %18 = arith.mulf %16, %17 : vector<1x128xf32>
      %c1 = arith.constant 1 : index
      %c0_9 = arith.constant 0 : index
      %19 = vector.load %arg9[%c1, %c0_9] : memref<8x128xf32, #tpu.memory_space<vmem>>, vector<1x128xf32>
      %cst_10 = arith.constant 1.250000e-01 : f32
      %20 = vector.broadcast %cst_10 : f32 to vector<1x128xf32>
      %21 = arith.mulf %19, %20 : vector<1x128xf32>
      %22 = arith.mulf %18, %18 : vector<1x128xf32>
      %23 = arith.subf %21, %22 : vector<1x128xf32>
      %cst_11 = arith.constant 0.000000e+00 : f32
      %24 = vector.broadcast %cst_11 : f32 to vector<1x128xf32>
      %25 = arith.maximumf %23, %24 : vector<1x128xf32>
      %c2 = arith.constant 2 : index
      %c0_12 = arith.constant 0 : index
      %26 = vector.load %arg9[%c2, %c0_12] : memref<8x128xf32, #tpu.memory_space<vmem>>, vector<1x128xf32>
      tpu.vector_store %arg9[%c2, %c0_12], %18 {strides = array<i32>} : memref<8x128xf32, #tpu.memory_space<vmem>>, vector<1x128xf32>,
      %c3 = arith.constant 3 : index
      %c0_13 = arith.constant 0 : index
      %27 = vector.load %arg9[%c3, %c0_13] : memref<8x128xf32, #tpu.memory_space<vmem>>, vector<1x128xf32>
      tpu.vector_store %arg9[%c3, %c0_13], %25 {strides = array<i32>} : memref<8x128xf32, #tpu.memory_space<vmem>>, vector<1x128xf32>,
      %cst_14 = arith.constant 0.000000e+00 : f32
      %28 = vector.broadcast %cst_14 : f32 to vector<8x128xf32>
      %c0_15 = arith.constant 0 : index
      %c0_16 = arith.constant 0 : index
      %29 = vector.load %arg7[%c0_15, %c0_16] : memref<8x128xf32, #tpu.memory_space<vmem>>, vector<8x128xf32>
      tpu.vector_store %arg7[%c0_15, %c0_16], %28 {strides = array<i32>} : memref<8x128xf32, #tpu.memory_space<vmem>>, vector<8x128xf32>,
      %c0_17 = arith.constant 0 : index
      %c0_18 = arith.constant 0 : index
      %30 = vector.load %arg7[%c0_17, %c0_18] : memref<8x128xf32, #tpu.memory_space<vmem>>, vector<1x128xf32>
      tpu.vector_store %arg7[%c0_17, %c0_18], %18 {strides = array<i32>} : memref<8x128xf32, #tpu.memory_space<vmem>>, vector<1x128xf32>,
      %c1_19 = arith.constant 1 : index
      %c0_20 = arith.constant 0 : index
      %31 = vector.load %arg7[%c1_19, %c0_20] : memref<8x128xf32, #tpu.memory_space<vmem>>, vector<1x128xf32>
      tpu.vector_store %arg7[%c1_19, %c0_20], %25 {strides = array<i32>} : memref<8x128xf32, #tpu.memory_space<vmem>>, vector<1x128xf32>,
      %c3_21 = arith.constant 3 : index
      %c0_22 = arith.constant 0 : index
      %32 = vector.load %arg4[%c3_21, %c0_22] : memref<8x128xf32, #tpu.memory_space<vmem>>, vector<1x128xf32>
      %cst_23 = arith.constant 1.000000e-01 : f32
      %33 = vector.broadcast %cst_23 : f32 to vector<1x128xf32>
      %34 = arith.mulf %33, %32 : vector<1x128xf32>
      %cst_24 = arith.constant 0.899999976 : f32
      %35 = vector.broadcast %cst_24 : f32 to vector<1x128xf32>
      %36 = arith.mulf %35, %18 : vector<1x128xf32>
      %37 = arith.addf %34, %36 : vector<1x128xf32>
      %c2_25 = arith.constant 2 : index
      %c0_26 = arith.constant 0 : index
      %38 = vector.load %arg7[%c2_25, %c0_26] : memref<8x128xf32, #tpu.memory_space<vmem>>, vector<1x128xf32>
      tpu.vector_store %arg7[%c2_25, %c0_26], %37 {strides = array<i32>} : memref<8x128xf32, #tpu.memory_space<vmem>>, vector<1x128xf32>,
      %c4 = arith.constant 4 : index
      %c0_27 = arith.constant 0 : index
      %39 = vector.load %arg4[%c4, %c0_27] : memref<8x128xf32, #tpu.memory_space<vmem>>, vector<1x128xf32>
      %cst_28 = arith.constant 1.000000e-01 : f32
      %40 = vector.broadcast %cst_28 : f32 to vector<1x128xf32>
      %41 = arith.mulf %40, %39 : vector<1x128xf32>
      %cst_29 = arith.constant 0.899999976 : f32
      %42 = vector.broadcast %cst_29 : f32 to vector<1x128xf32>
      %43 = arith.mulf %42, %25 : vector<1x128xf32>
      %44 = arith.addf %41, %43 : vector<1x128xf32>
      %c3_30 = arith.constant 3 : index
      %c0_31 = arith.constant 0 : index
      %45 = vector.load %arg7[%c3_30, %c0_31] : memref<8x128xf32, #tpu.memory_space<vmem>>, vector<1x128xf32>
      tpu.vector_store %arg7[%c3_30, %c0_31], %44 {strides = array<i32>} : memref<8x128xf32, #tpu.memory_space<vmem>>, vector<1x128xf32>,
    } else {
    }
    %c1_i32 = arith.constant 1 : i32
    %13 = arith.cmpi eq, %arg0, %c1_i32 : i32
    %14 = arith.extui %13 : i1 to i32
    %c0_i32_7 = arith.constant 0 : i32
    %15 = arith.cmpi ne, %14, %c0_i32_7 : i32
    scf.if %15 {
      %16 = arith.index_cast %arg1 : i32 to index
      %c0 = arith.constant 0 : index
      %c0_8 = arith.constant 0 : index
      %17 = vector.load %arg8[%16, %c0, %c0_8] : memref<1x8x128xf32, #tpu.memory_space<vmem>>, vector<1x8x128xf32>
      %18 = vector.shape_cast %17 : vector<1x8x128xf32> to vector<8x128xf32>
      %c2 = arith.constant 2 : index
      %c0_9 = arith.constant 0 : index
      %19 = vector.load %arg9[%c2, %c0_9] : memref<8x128xf32, #tpu.memory_space<vmem>>, vector<1x128xf32>
      %c3 = arith.constant 3 : index
      %c0_10 = arith.constant 0 : index
      %20 = vector.load %arg9[%c3, %c0_10] : memref<8x128xf32, #tpu.memory_space<vmem>>, vector<1x128xf32>
      %c1 = arith.constant 1 : index
      %c0_11 = arith.constant 0 : index
      %21 = vector.load %arg4[%c1, %c0_11] : memref<8x128xf32, #tpu.memory_space<vmem>>, vector<1x128xf32>
      %c2_12 = arith.constant 2 : index
      %c0_13 = arith.constant 0 : index
      %22 = vector.load %arg4[%c2_12, %c0_13] : memref<8x128xf32, #tpu.memory_space<vmem>>, vector<1x128xf32>
      %c5 = arith.constant 5 : index
      %c0_14 = arith.constant 0 : index
      %23 = vector.load %arg4[%c5, %c0_14] : memref<8x128xf32, #tpu.memory_space<vmem>>, vector<1x128xf32>
      %24 = vector.broadcast %19 : vector<1x128xf32> to vector<8x128xf32>
      %25 = arith.subf %18, %24 : vector<8x128xf32>
      %cst = arith.constant 9.99999974E-6 : f32
      %26 = vector.broadcast %cst : f32 to vector<1x128xf32>
      %27 = arith.addf %20, %26 : vector<1x128xf32>
      %28 = math.rsqrt %27 : vector<1x128xf32>
      %29 = vector.broadcast %28 : vector<1x128xf32> to vector<8x128xf32>
      %30 = arith.mulf %25, %29 : vector<8x128xf32>
      %31 = vector.broadcast %21 : vector<1x128xf32> to vector<8x128xf32>
      %32 = arith.mulf %31, %30 : vector<8x128xf32>
      %33 = vector.broadcast %22 : vector<1x128xf32> to vector<8x128xf32>
      %34 = arith.addf %32, %33 : vector<8x128xf32>
      %cst_15 = arith.constant 0.000000e+00 : f32
      %35 = vector.broadcast %cst_15 : f32 to vector<8x128xf32>
      %36 = arith.maximumf %34, %35 : vector<8x128xf32>
      %37 = arith.truncf %36 : vector<8x128xf32> to vector<8x128xbf16>
      %c0_16 = arith.constant 0 : index
      %c0_17 = arith.constant 0 : index
      %38 = vector.load %arg5[%c0_16, %c0_17] : memref<128x128xbf16, #tpu.memory_space<vmem>>, vector<128x128xbf16>
      %cst_18 = arith.constant dense<0.000000e+00> : vector<8x128xf32>
      %39 = tpu.matmul %37, %38, %cst_18 {dimension_numbers = #tpu.dot_dimension_numbers<[1], [0], [0], [1], [0, 0, 1, 1], [], []>} : vector<8x128xbf16>, vector<128x128xbf16>, vector<8x128xf32> -> vector<8x128xf32>
      %40 = vector.broadcast %23 : vector<1x128xf32> to vector<8x128xf32>
      %41 = arith.addf %39, %40 : vector<8x128xf32>
      %c0_19 = arith.constant 0 : index
      %c0_20 = arith.constant 0 : index
      %42 = vector.load %arg6[%c0_19, %c0_20] : memref<8x128xf32, #tpu.memory_space<vmem>>, vector<8x128xf32>
      tpu.vector_store %arg6[%c0_19, %c0_20], %41 {strides = array<i32>} : memref<8x128xf32, #tpu.memory_space<vmem>>, vector<8x128xf32>,
    } else {
    }
    return
  }
  func.func @transform_0(%arg0: i32, %arg1: i32) -> (i32, i32) {
    %c1_i32 = arith.constant 1 : i32
    %0 = arith.subi %c1_i32, %arg0 : i32
    %1 = arith.muli %arg1, %0 : i32
    %c0_i32 = arith.constant 0 : i32
    %2 = arith.muli %c0_i32, %arg0 : i32
    %3 = arith.addi %1, %2 : i32
    %c0_i32_0 = arith.constant 0 : i32
    %c0_i32_1 = arith.constant 0 : i32
    return %3, %c0_i32_0 : i32, i32
  }
  func.func @transform_1(%arg0: i32, %arg1: i32) -> (i32, i32) {
    %c0_i32 = arith.constant 0 : i32
    %c0_i32_0 = arith.constant 0 : i32
    %c0_i32_1 = arith.constant 0 : i32
    return %c0_i32, %c0_i32_0 : i32, i32
  }
  func.func @transform_2(%arg0: i32, %arg1: i32) -> (i32, i32) {
    %c0_i32 = arith.constant 0 : i32
    %c0_i32_0 = arith.constant 0 : i32
    %c0_i32_1 = arith.constant 0 : i32
    return %c0_i32, %c0_i32_0 : i32, i32
  }
  func.func @transform_3(%arg0: i32, %arg1: i32) -> (i32, i32) {
    %c0_i32 = arith.constant 0 : i32
    %c0_i32_0 = arith.constant 0 : i32
    %c0_i32_1 = arith.constant 0 : i32
    return %c0_i32, %c0_i32_0 : i32, i32
  }
  func.func @transform_4(%arg0: i32, %arg1: i32) -> (i32, i32) {
    %0 = arith.muli %arg1, %arg0 : i32
    %c0_i32 = arith.constant 0 : i32
    %c0_i32_0 = arith.constant 0 : i32
    return %0, %c0_i32 : i32, i32
  }
  func.func @transform_5(%arg0: i32, %arg1: i32) -> (i32, i32) {
    %c0_i32 = arith.constant 0 : i32
    %c0_i32_0 = arith.constant 0 : i32
    %c0_i32_1 = arith.constant 0 : i32
    return %c0_i32, %c0_i32_0 : i32, i32
  }
}

</mosaic_0001>

<llo_original>
// kernel: tpu_custom_call.1
$region0: #{tpu_custom_call.1}
  #allocation0 [shape = 'u32[]', space=smem, size = 0x4, offset = 0x4, fixed_abs, tag = 'smem constant byte address 0x4 - core index']
  #allocation1 [shape = 'u32[144,128]{1,0:T(1,128)}', space=vmem, size = 0x12000, scoped, tag = 'internal scratch']
  #allocation2 [shape = 'f32[1,8,128]{2,1,0:T(8,128)}', space=vmem, size = 0x1000, scoped, tag = 'scratch operand']
  #allocation3 [shape = 'f32[8,128]{1,0:T(8,128)}', space=vmem, size = 0x1000, scoped, tag = 'scratch operand']
  %s0 = inlined_call_operand.hbm [shape: f32[8,784], index: 0, kind: input, shape index: {}]
  %s1 = inlined_call_operand.hbm [shape: bf16[784,128], index: 1, kind: input, shape index: {}]
  %s2 = inlined_call_operand.hbm [shape: f32[8,128], index: 2, kind: input, shape index: {}]
  %s3 = inlined_call_operand.hbm [shape: bf16[128,128], index: 3, kind: input, shape index: {}]
  %s4 = inlined_call_operand.hbm [shape: f32[8,128], index: 4, kind: output, shape index: {0}]
  %s5 = inlined_call_operand.hbm [shape: f32[8,128], index: 5, kind: output, shape index: {1}]
  %6 = xla_tuple %s4, %s5
  %s7 = sld [smem:[#allocation0]]
  $region89: #{tpu_custom_call.1} parent=0
    _
  %s9 = ssub.s32 1, %s7
  %s10 = scalar_select 0, %s9, %s7
  $region1: #{tpu_custom_call.1} parent=0
    #allocation4 [shape = 'u8[57344]{0}', space=vmem, size = 0xe000, scoped, tag = 'input window, operand 0']
    #allocation5 [shape = 's32[2]{0}', space=sflag, size = 0x8, scoped, tag = 'scoped memory for tpu_custom_call.1']
    #allocation6 [shape = 's32[2]{0}', space=sflag, size = 0x8, scoped, tag = 'scoped memory for tpu_custom_call.1']
    #allocation7 [shape = 'u8[200704]{0}', space=vmem, size = 0x31000, scoped, tag = 'input window, operand 1, single buffered']
    #allocation8 [shape = 's32[1]{0}', space=sflag, size = 0x4, scoped, tag = 'scoped memory for tpu_custom_call.1']
    #allocation9 [shape = 'u8[4096]{0}', space=vmem, size = 0x1000, scoped, tag = 'input window, operand 2, single buffered']
    #allocation10 [shape = 'u8[32768]{0}', space=vmem, size = 0x8000, scoped, tag = 'input window, operand 3, single buffered']
    #allocation11 [shape = 's32[1]{0}', space=sflag, size = 0x4, scoped, tag = 'scoped memory for tpu_custom_call.1']
    #allocation12 [shape = 'u8[8192]{0}', space=vmem, size = 0x2000, scoped, tag = 'output window, operand 0']
    #allocation13 [shape = 'u8[4096]{0}', space=vmem, size = 0x1000, scoped, tag = 'output window, operand 1, single buffered']
    #allocation14 [shape = 's32[1]{0}', space=sflag, size = 0x4, scoped, tag = 'scoped memory for tpu_custom_call.1']
    %11 = vsyncpa [#allocation5], 0
    %s12 = scalar_lea.sflag [#allocation5], 1
    %13 = vsyncpa %s12, 0
    %14 = vsyncpa [#allocation8], 0
    %15 = vsyncpa [#allocation11], 0
    %16 = vsyncpa [#allocation6], 0
    %s17 = scalar_lea.sflag [#allocation6], 1
    %18 = vsyncpa %s17, 0
    %19 = vsyncpa [#allocation14], 0
    loop: start=0, step=1, limit=4
    $region2: #{tpu_custom_call.1} parent=1 // loop_pre_header
      _
    $region3: #{tpu_custom_call.1} parent=1 // loop_header
      %s21 = sphi 0, %s25
      %p22 = scmp.ge.s32.totalorder %s21, 4
      %s28 = sphi 0, %s40
      %s29 = sphi 0, %s36
      %s30 = sphi 0, %s28
      %s31 = sphi 0, %s29
      %s32 = sphi 0, %s30
      %s33 = sphi 0, %s31
      %s47 = sphi 0, %s49
      %s50 = sphi 0, %s47
      %s51 = sphi 0, %s50
      %s67 = sphi 0, %s51
      %s71 = sphi 0, %s71
      %s73 = sphi 0, %s71
      %s74 = sphi 0, %s73
      %s88 = sphi 0, %s74
      %s92 = sphi 0, %s92
      %s94 = sphi 0, %s92
      %s95 = sphi 0, %s94
      %s109 = sphi 0, %s95
      %s113 = sphi 0, %s113
      %s115 = sphi 0, %s113
      %s116 = sphi 0, %s115
      %s130 = sphi 0, %s116
      %s138 = sphi 0, %s140
      %s141 = sphi 0, %s138
      %s142 = sphi 0, %s141
      %s158 = sphi 0, %s142
      %s162 = sphi 0, %s162
      %s164 = sphi 0, %s162
      %s165 = sphi 0, %s164
      %s179 = sphi 0, %s165
    $region4: #{tpu_custom_call.1} parent=1 // loop_header_branch
      %24 = sbr.rel (%p22) target = $region8
    $region5: #{tpu_custom_call.1} parent=1 // loop_body
      %s26 = ssub.s32 %s21, 1
      %s27 = ssub.s32 %s21, 2
      %s34 = sadd.s32 1, %s29
      %p35 = scmp.ge.s32.totalorder %s34, 1
      %s36 = scalar_select %p35, 0, %s34
      %s37 = sadd.s32 1, %s28
      %s38 = scalar_select %p35, %s37, %s28
      %p39 = scmp.ge.s32.totalorder %s38, 2
      %s40 = scalar_select %p39, 0, %s38
      %s41 = ssub.s32 1, %s28
      %s42 = smul.u32 %s29, %s41
      %s43 = ssub.s32 1, %s40
      %s44 = smul.u32 %s36, %s43
      %s45 = ssub.s32 %s42, %s44
      %p46 = scmp.eq.s32.totalorder %s45, 0
      %s48 = sadd.s32 %s47, 1
      %s49 = scalar_select %p46, %s47, %s48
      %p52 = pneg %p46
      %p53 = scmp.eq.s32.totalorder %s21, 1
      %p54 = por %p52, %p53
      %p55 = scmp.ne.s32.totalorder %s47, %s50
      %p56 = scmp.eq.s32.totalorder %s21, 0
      %p57 = por %p55, %p56
      %p58 = scmp.ne.s32.totalorder %s47, %s50
      %p59 = scmp.eq.s32.totalorder %s26, 1
      %p60 = por %p58, %p59
      %p61 = scmp.ne.s32.totalorder %s50, %s51
      %p62 = scmp.eq.s32.totalorder %s26, 0
      %p63 = por %p61, %p62
      %p64 = scmp.ne.s32.totalorder %s50, %s51
      %p65 = scmp.eq.s32.totalorder %s27, 1
      %p66 = por %p64, %p65
      %p68 = scmp.ne.s32.totalorder %s51, %s67
      %p69 = scmp.eq.s32.totalorder %s27, 0
      %p70 = por %p68, %p69
      %s72 = sadd.s32 %s71, 1
      %p75 = scmp.eq.s32.totalorder %s21, 1
      %p76 = scmp.ne.s32.totalorder %s71, %s73
      %p77 = scmp.eq.s32.totalorder %s21, 0
      %p78 = por %p76, %p77
      %p79 = scmp.ne.s32.totalorder %s71, %s73
      %p80 = scmp.eq.s32.totalorder %s26, 1
      %p81 = por %p79, %p80
      %p82 = scmp.ne.s32.totalorder %s73, %s74
      %p83 = scmp.eq.s32.totalorder %s26, 0
      %p84 = por %p82, %p83
      %p85 = scmp.ne.s32.totalorder %s73, %s74
      %p86 = scmp.eq.s32.totalorder %s27, 1
      %p87 = por %p85, %p86
      %p89 = scmp.ne.s32.totalorder %s74, %s88
      %p90 = scmp.eq.s32.totalorder %s27, 0
      %p91 = por %p89, %p90
      %s93 = sadd.s32 %s92, 1
      %p96 = scmp.eq.s32.totalorder %s21, 1
      %p97 = scmp.ne.s32.totalorder %s92, %s94
      %p98 = scmp.eq.s32.totalorder %s21, 0
      %p99 = por %p97, %p98
      %p100 = scmp.ne.s32.totalorder %s92, %s94
      %p101 = scmp.eq.s32.totalorder %s26, 1
      %p102 = por %p100, %p101
      %p103 = scmp.ne.s32.totalorder %s94, %s95
      %p104 = scmp.eq.s32.totalorder %s26, 0
      %p105 = por %p103, %p104
      %p106 = scmp.ne.s32.totalorder %s94, %s95
      %p107 = scmp.eq.s32.totalorder %s27, 1
      %p108 = por %p106, %p107
      %p110 = scmp.ne.s32.totalorder %s95, %s109
      %p111 = scmp.eq.s32.totalorder %s27, 0
      %p112 = por %p110, %p111
      %s114 = sadd.s32 %s113, 1
      %p117 = scmp.eq.s32.totalorder %s21, 1
      %p118 = scmp.ne.s32.totalorder %s113, %s115
      %p119 = scmp.eq.s32.totalorder %s21, 0
      %p120 = por %p118, %p119
      %p121 = scmp.ne.s32.totalorder %s113, %s115
      %p122 = scmp.eq.s32.totalorder %s26, 1
      %p123 = por %p121, %p122
      %p124 = scmp.ne.s32.totalorder %s115, %s116
      %p125 = scmp.eq.s32.totalorder %s26, 0
      %p126 = por %p124, %p125
      %p127 = scmp.ne.s32.totalorder %s115, %s116
      %p128 = scmp.eq.s32.totalorder %s27, 1
      %p129 = por %p127, %p128
      %p131 = scmp.ne.s32.totalorder %s116, %s130
      %p132 = scmp.eq.s32.totalorder %s27, 0
      %p133 = por %p131, %p132
      %s134 = smul.u32 %s29, %s28
      %s135 = smul.u32 %s36, %s40
      %s136 = ssub.s32 %s134, %s135
      %p137 = scmp.eq.s32.totalorder %s136, 0
      %s139 = sadd.s32 %s138, 1
      %s140 = scalar_select %p137, %s138, %s139
      %p143 = pneg %p137
      %p144 = scmp.eq.s32.totalorder %s21, 1
      %p145 = por %p143, %p144
      %p146 = scmp.ne.s32.totalorder %s138, %s141
      %p147 = scmp.eq.s32.totalorder %s21, 0
      %p148 = por %p146, %p147
      %p149 = scmp.ne.s32.totalorder %s138, %s141
      %p150 = scmp.eq.s32.totalorder %s26, 1
      %p151 = por %p149, %p150
      %p152 = scmp.ne.s32.totalorder %s141, %s142
      %p153 = scmp.eq.s32.totalorder %s26, 0
      %p154 = por %p152, %p153
      %p155 = scmp.ne.s32.totalorder %s141, %s142
      %p156 = scmp.eq.s32.totalorder %s27, 1
      %p157 = por %p155, %p156
      %p159 = scmp.ne.s32.totalorder %s142, %s158
      %p160 = scmp.eq.s32.totalorder %s27, 0
      %p161 = por %p159, %p160
      %s163 = sadd.s32 %s162, 1
      %p166 = scmp.eq.s32.totalorder %s21, 1
      %p167 = scmp.ne.s32.totalorder %s162, %s164
      %p168 = scmp.eq.s32.totalorder %s21, 0
      %p169 = por %p167, %p168
      %p170 = scmp.ne.s32.totalorder %s162, %s164
      %p171 = scmp.eq.s32.totalorder %s26, 1
      %p172 = por %p170, %p171
      %p173 = scmp.ne.s32.totalorder %s164, %s165
      %p174 = scmp.eq.s32.totalorder %s26, 0
      %p175 = por %p173, %p174
      %p176 = scmp.ne.s32.totalorder %s164, %s165
      %p177 = scmp.eq.s32.totalorder %s27, 1
      %p178 = por %p176, %p177
      %p180 = scmp.ne.s32.totalorder %s165, %s179
      %p181 = scmp.eq.s32.totalorder %s27, 0
      %p182 = por %p180, %p181
      %p183 = scmp.le.s32.totalorder 1, %s21
      %p184 = scmp.lt.s32.totalorder %s21, 3
      %p185 = pnand %p183, %p184
      %p186 = pneg %p185
      // Predicated region
      $region9: #{tpu_custom_call.1} parent=5 // pred_check
        _
      $region10: #{tpu_custom_call.1} parent=5 // pred_check_branch
        %188 = sbr.rel (%p185) target = $region12
      $region11: #{tpu_custom_call.1} parent=5 // pred_region
        %s189 = ssub.s32 %s21, 1
        // Predicated region
        $region13: #{tpu_custom_call.1} parent=11 // pred_check
          %p190 = pneg %p84
        $region14: #{tpu_custom_call.1} parent=11 // pred_check_branch
          %192 = sbr.rel (%p190) target = $region16
        $region15: #{tpu_custom_call.1} parent=11 // pred_region
          %s194 = ssub.s32 6272, 6272
          %195 = vsyncadd [#allocation8], %s194
          %s196 = sshll.u32 [#allocation7], 4
          %s197 = int_to_ptr.vmem [resolvable:$true] %s196
          %202 = dma.hbm_to_vmem [thread:$0]  %s1, 6272, %s197, [#allocation8], 64, 64, 4
        $region16: #{tpu_custom_call.1} parent=11 // pred_fallthru
          _
        // Predicated region
        $region17: #{tpu_custom_call.1} parent=11 // pred_check
          %p203 = pneg %p105
        $region18: #{tpu_custom_call.1} parent=11 // pred_check_branch
          %205 = sbr.rel (%p203) target = $region20
        $region19: #{tpu_custom_call.1} parent=11 // pred_region
          %s207 = ssub.s32 128, 128
          %208 = vsyncadd [#allocation8], %s207
          %s210 = sshll.u32 [#allocation9], 4
          %s211 = int_to_ptr.vmem [resolvable:$true] %s210
          %213 = dma.hbm_to_vmem [thread:$0]  %s2, 128, %s211, [#allocation8]
        $region20: #{tpu_custom_call.1} parent=11 // pred_fallthru
          _
        // Predicated region
        $region21: #{tpu_custom_call.1} parent=11 // pred_check
          %p214 = pneg %p126
        $region22: #{tpu_custom_call.1} parent=11 // pred_check_branch
          %216 = sbr.rel (%p214) target = $region24
        $region23: #{tpu_custom_call.1} parent=11 // pred_region
          %s218 = ssub.s32 1024, 1024
          %219 = vsyncadd [#allocation11], %s218
          %s220 = sshll.u32 [#allocation10], 4
          %s221 = int_to_ptr.vmem [resolvable:$true] %s220
          %226 = dma.hbm_to_vmem [thread:$0]  %s3, 1024, %s221, [#allocation11], 64, 64, 4
        $region24: #{tpu_custom_call.1} parent=11 // pred_fallthru
          _
      $region12: #{tpu_custom_call.1} parent=5 // pred_fallthru
        _
      %p227 = scmp.lt.s32.totalorder %s21, 2
      // Predicated region
      $region25: #{tpu_custom_call.1} parent=5 // pred_check
        %p228 = pneg %p227
      $region26: #{tpu_custom_call.1} parent=5 // pred_check_branch
        %230 = sbr.rel (%p228) target = $region28
      $region27: #{tpu_custom_call.1} parent=5 // pred_region
        // Predicated region
        $region29: #{tpu_custom_call.1} parent=27 // pred_check
          %p231 = pneg %p57
        $region30: #{tpu_custom_call.1} parent=27 // pred_check_branch
          %233 = sbr.rel (%p231) target = $region32
        $region31: #{tpu_custom_call.1} parent=27 // pred_region
          %s234 = sand.u32 %s47, 1
          %s235 = scalar_lea.sflag [#allocation5], %s234
          %s236 = sand.u32 %s47, 1
          %s237 = smul.addr %s236, 56
          %s238 = scalar_lea.vmem [#allocation4], %s237
          %s239 = ssub.s32 1, %s28
          %s240 = smul.u32 %s29, %s239
          %s242 = ssub.s32 896, 896
          %243 = vsyncadd %s235, %s242
          %s244 = smul.addr %s240, 7
          %s245 = smul.addr %s244, 128
          %s246 = scalar_lea.hbm %s0, %s245
          %s248 = sshll.u32 %s238, 4
          %s249 = int_to_ptr.vmem [resolvable:$true] %s248
          %251 = dma.hbm_to_vmem [thread:$0]  %s246, 896, %s249, %s235
        $region32: #{tpu_custom_call.1} parent=27 // pred_fallthru
          _
      $region28: #{tpu_custom_call.1} parent=5 // pred_fallthru
        _
      %p252 = scmp.le.s32.totalorder 1, %s21
      %p253 = scmp.lt.s32.totalorder %s21, 3
      %p254 = pnand %p252, %p253
      %p255 = pneg %p254
      // Predicated region
      $region33: #{tpu_custom_call.1} parent=5 // pred_check
        _
      $region34: #{tpu_custom_call.1} parent=5 // pred_check_branch
        %257 = sbr.rel (%p254) target = $region36
      $region35: #{tpu_custom_call.1} parent=5 // pred_region
        %s258 = ssub.s32 %s21, 1
        %s259 = sand.u32 %s50, 1
        %s260 = scalar_lea.sflag [#allocation5], %s259
        %s261 = sand.u32 %s50, 1
        %s262 = smul.addr %s261, 56
        %s263 = scalar_lea.vmem [#allocation4], %s262
        // Predicated region
        $region37: #{tpu_custom_call.1} parent=35 // pred_check
          %p264 = pneg %p63
        $region38: #{tpu_custom_call.1} parent=35 // pred_check_branch
          %266 = sbr.rel (%p264) target = $region40
        $region39: #{tpu_custom_call.1} parent=35 // pred_region
          %267 = dma.done %s260, 896
        $region40: #{tpu_custom_call.1} parent=35 // pred_fallthru
          _
        // Predicated region
        $region41: #{tpu_custom_call.1} parent=35 // pred_check
          %p268 = pneg %p84
        $region42: #{tpu_custom_call.1} parent=35 // pred_check_branch
          %270 = sbr.rel (%p268) target = $region44
        $region43: #{tpu_custom_call.1} parent=35 // pred_region
          %271 = dma.done [#allocation8], 6272
        $region44: #{tpu_custom_call.1} parent=35 // pred_fallthru
          _
        // Predicated region
        $region45: #{tpu_custom_call.1} parent=35 // pred_check
          %p272 = pneg %p105
        $region46: #{tpu_custom_call.1} parent=35 // pred_check_branch
          %274 = sbr.rel (%p272) target = $region48
        $region47: #{tpu_custom_call.1} parent=35 // pred_region
          %275 = dma.done [#allocation8], 128
        $region48: #{tpu_custom_call.1} parent=35 // pred_fallthru
          _
        // Predicated region
        $region49: #{tpu_custom_call.1} parent=35 // pred_check
          %p276 = pneg %p126
        $region50: #{tpu_custom_call.1} parent=35 // pred_check_branch
          %278 = sbr.rel (%p276) target = $region52
        $region51: #{tpu_custom_call.1} parent=35 // pred_region
          %279 = dma.done [#allocation11], 1024
        $region52: #{tpu_custom_call.1} parent=35 // pred_fallthru
          _
        %s280 = sand.u32 %s50, 1
        %s281 = scalar_lea.sflag [#allocation5], %s280
        %s282 = sand.u32 %s50, 1
        %s283 = smul.addr %s282, 56
        %s284 = scalar_lea.vmem [#allocation4], %s283
        %p285 = pneg %p63
        %p286 = pneg %p60
        %p287 = pneg %p84
        %p288 = pneg %p81
        %p289 = pneg %p105
        %p290 = pneg %p102
        %p291 = pneg %p126
        %p292 = pneg %p123
        %p293 = pneg %p154
        %p294 = pneg %p151
        %s295 = sand.u32 %s141, 1
        %s296 = scalar_lea.sflag [#allocation6], %s295
        %s297 = sand.u32 %s141, 1
        %s298 = smul.addr %s297, 8
        %s299 = scalar_lea.vmem [#allocation12], %s298
        %p300 = pneg %p175
        %p301 = pneg %p172
        %s302 = ssub.s32 1, %s30
        %s303 = smul.u32 %s31, %s302
        %s304 = smul.u32 %s31, %s30
        %p306 = scmp.eq.s32.totalorder %s30, 0
        %p307 = scmp.eq.s32.totalorder %s31, 0
        %p308 = pnand %p306, %p307
        %p309 = pneg %p308
        // Predicated region
        $region53: #{tpu_custom_call.1} parent=35 // pred_check
          _
        $region54: #{tpu_custom_call.1} parent=35 // pred_check_branch
          %311 = sbr.rel (%p308) target = $region56
        $region55: #{tpu_custom_call.1} parent=35 // pred_region
          %312 = vst [vmem:[#allocation3] sm:$0xff] 0.0
        $region56: #{tpu_custom_call.1} parent=35 // pred_fallthru
          _
        // Predicated region
        $region57: #{tpu_custom_call.1} parent=35 // pred_check
          %p313 = pneg %p306
        $region58: #{tpu_custom_call.1} parent=35 // pred_check_branch
          %315 = sbr.rel (%p313) target = $region60
        $region59: #{tpu_custom_call.1} parent=35 // pred_region
          %v316 = vld [vmem:[%s263] sm:$0xff]
          %v317 = vld [vmem:[%s263 + $0x8] sm:$0xff]
          %v318 = vld [vmem:[%s263 + $0x10] sm:$0xff]
          %v319 = vld [vmem:[%s263 + $0x18] sm:$0xff]
          %v320 = vld [vmem:[%s263 + $0x20] sm:$0xff]
          %v321 = vld [vmem:[%s263 + $0x28] sm:$0xff]
          %v322 = vld [vmem:[%s263 + $0x30] sm:$0xff]
          %v323 = vpack.c.bf16 %v316, %v316
          %v324 = vpack.c.bf16 %v317, %v317
          %v325 = vpack.c.bf16 %v318, %v318
          %v326 = vpack.c.bf16 %v319, %v319
          %v327 = vpack.c.bf16 %v320, %v320
          %v328 = vpack.c.bf16 %v321, %v321
          %v329 = vpack.c.bf16 %v322, %v322
          %v330 = vld [vmem:[#allocation7] sm:$0xf]
          %v331 = vld [vmem:[#allocation7 + $0x4] sm:$0xf]
          %v332 = vld [vmem:[#allocation7 + $0x8] sm:$0xf]
          %v333 = vld [vmem:[#allocation7 + $0xc] sm:$0xf]
          %v334 = vld [vmem:[#allocation7 + $0x10] sm:$0xf]
          %v335 = vld [vmem:[#allocation7 + $0x14] sm:$0xf]
          %v336 = vld [vmem:[#allocation7 + $0x18] sm:$0xf]
          %v337 = vld [vmem:[#allocation7 + $0x1c] sm:$0xf]
          %v338 = vld [vmem:[#allocation7 + $0x20] sm:$0xf]
          %v339 = vld [vmem:[#allocation7 + $0x24] sm:$0xf]
          %v340 = vld [vmem:[#allocation7 + $0x28] sm:$0xf]
          %v341 = vld [vmem:[#allocation7 + $0x2c] sm:$0xf]
          %v342 = vld [vmem:[#allocation7 + $0x30] sm:$0xf]
          %v343 = vld [vmem:[#allocation7 + $0x34] sm:$0xf]
          %v344 = vld [vmem:[#allocation7 + $0x38] sm:$0xf]
          %v345 = vld [vmem:[#allocation7 + $0x3c] sm:$0xf]
          %v346 = vld [vmem:[#allocation7 + $0x40] sm:$0xf]
          %v347 = vld [vmem:[#allocation7 + $0x44] sm:$0xf]
          %v348 = vld [vmem:[#allocation7 + $0x48] sm:$0xf]
          %v349 = vld [vmem:[#allocation7 + $0x4c] sm:$0xf]
          %v350 = vld [vmem:[#allocation7 + $0x50] sm:$0xf]
          %v351 = vld [vmem:[#allocation7 + $0x54] sm:$0xf]
          %v352 = vld [vmem:[#allocation7 + $0x58] sm:$0xf]
          %v353 = vld [vmem:[#allocation7 + $0x5c] sm:$0xf]
          %v354 = vld [vmem:[#allocation7 + $0x60] sm:$0xf]
          %v355 = vld [vmem:[#allocation7 + $0x64] sm:$0xf]
          %v356 = vld [vmem:[#allocation7 + $0x68] sm:$0xf]
          %v357 = vld [vmem:[#allocation7 + $0x6c] sm:$0xf]
          %v358 = vld [vmem:[#allocation7 + $0x70] sm:$0xf]
          %v359 = vld [vmem:[#allocation7 + $0x74] sm:$0xf]
          %v360 = vld [vmem:[#allocation7 + $0x78] sm:$0xf]
          %v361 = vld [vmem:[#allocation7 + $0x7c] sm:$0xf]
          %v362 = vld [vmem:[#allocation7 + $0x80] sm:$0xf]
          %v363 = vld [vmem:[#allocation7 + $0x84] sm:$0xf]
          %v364 = vld [vmem:[#allocation7 + $0x88] sm:$0xf]
          %v365 = vld [vmem:[#allocation7 + $0x8c] sm:$0xf]
          %v366 = vld [vmem:[#allocation7 + $0x90] sm:$0xf]
          %v367 = vld [vmem:[#allocation7 + $0x94] sm:$0xf]
          %v368 = vld [vmem:[#allocation7 + $0x98] sm:$0xf]
          %v369 = vld [vmem:[#allocation7 + $0x9c] sm:$0xf]
          %v370 = vld [vmem:[#allocation7 + $0xa0] sm:$0xf]
          %v371 = vld [vmem:[#allocation7 + $0xa4] sm:$0xf]
          %v372 = vld [vmem:[#allocation7 + $0xa8] sm:$0xf]
          %v373 = vld [vmem:[#allocation7 + $0xac] sm:$0xf]
          %v374 = vld [vmem:[#allocation7 + $0xb0] sm:$0xf]
          %v375 = vld [vmem:[#allocation7 + $0xb4] sm:$0xf]
          %v376 = vld [vmem:[#allocation7 + $0xb8] sm:$0xf]
          %v377 = vld [vmem:[#allocation7 + $0xbc] sm:$0xf]
          %v378 = vld [vmem:[#allocation7 + $0xc0] sm:$0xf]
          %v379 = vld [vmem:[#allocation7 + $0xc4] sm:$0xf]
          %v380 = vld [vmem:[#allocation7 + $0xc8] sm:$0xf]
          %v381 = vld [vmem:[#allocation7 + $0xcc] sm:$0xf]
          %v382 = vld [vmem:[#allocation7 + $0xd0] sm:$0xf]
          %v383 = vld [vmem:[#allocation7 + $0xd4] sm:$0xf]
          %v384 = vld [vmem:[#allocation7 + $0xd8] sm:$0xf]
          %v385 = vld [vmem:[#allocation7 + $0xdc] sm:$0xf]
          %v386 = vld [vmem:[#allocation7 + $0xe0] sm:$0xf]
          %v387 = vld [vmem:[#allocation7 + $0xe4] sm:$0xf]
          %v388 = vld [vmem:[#allocation7 + $0xe8] sm:$0xf]
          %v389 = vld [vmem:[#allocation7 + $0xec] sm:$0xf]
          %v390 = vld [vmem:[#allocation7 + $0xf0] sm:$0xf]
          %v391 = vld [vmem:[#allocation7 + $0xf4] sm:$0xf]
          %v392 = vld [vmem:[#allocation7 + $0xf8] sm:$0xf]
          %v393 = vld [vmem:[#allocation7 + $0xfc] sm:$0xf]
          %v394 = vld [vmem:[#allocation7 + $0x100] sm:$0xf]
          %v395 = vld [vmem:[#allocation7 + $0x104] sm:$0xf]
          %v396 = vld [vmem:[#allocation7 + $0x108] sm:$0xf]
          %v397 = vld [vmem:[#allocation7 + $0x10c] sm:$0xf]
          %v398 = vld [vmem:[#allocation7 + $0x110] sm:$0xf]
          %v399 = vld [vmem:[#allocation7 + $0x114] sm:$0xf]
          %v400 = vld [vmem:[#allocation7 + $0x118] sm:$0xf]
          %v401 = vld [vmem:[#allocation7 + $0x11c] sm:$0xf]
          %v402 = vld [vmem:[#allocation7 + $0x120] sm:$0xf]
          %v403 = vld [vmem:[#allocation7 + $0x124] sm:$0xf]
          %v404 = vld [vmem:[#allocation7 + $0x128] sm:$0xf]
          %v405 = vld [vmem:[#allocation7 + $0x12c] sm:$0xf]
          %v406 = vld [vmem:[#allocation7 + $0x130] sm:$0xf]
          %v407 = vld [vmem:[#allocation7 + $0x134] sm:$0xf]
          %v408 = vld [vmem:[#allocation7 + $0x138] sm:$0xf]
          %v409 = vld [vmem:[#allocation7 + $0x13c] sm:$0xf]
          %v410 = vld [vmem:[#allocation7 + $0x140] sm:$0xf]
          %v411 = vld [vmem:[#allocation7 + $0x144] sm:$0xf]
          %v412 = vld [vmem:[#allocation7 + $0x148] sm:$0xf]
          %v413 = vld [vmem:[#allocation7 + $0x14c] sm:$0xf]
          %v414 = vld [vmem:[#allocation7 + $0x150] sm:$0xf]
          %v415 = vld [vmem:[#allocation7 + $0x154] sm:$0xf]
          %v416 = vld [vmem:[#allocation7 + $0x158] sm:$0xf]
          %v417 = vld [vmem:[#allocation7 + $0x15c] sm:$0xf]
          %v418 = vld [vmem:[#allocation7 + $0x160] sm:$0xf]
          %v419 = vld [vmem:[#allocation7 + $0x164] sm:$0xf]
          %v420 = vld [vmem:[#allocation7 + $0x168] sm:$0xf]
          %v421 = vld [vmem:[#allocation7 + $0x16c] sm:$0xf]
          %v422 = vld [vmem:[#allocation7 + $0x170] sm:$0xf]
          %v423 = vld [vmem:[#allocation7 + $0x174] sm:$0xf]
          %v424 = vld [vmem:[#allocation7 + $0x178] sm:$0xf]
          %v425 = vld [vmem:[#allocation7 + $0x17c] sm:$0xf]
          %v426 = vld [vmem:[#allocation7 + $0x180] sm:$0xf]
          %v427 = vld [vmem:[#allocation7 + $0x184] sm:$0xf]
          %v428 = vld [vmem:[#allocation9] sm:$0x1]
          %v429 = vlaneseq
          %v430 = vshrl.u32 %v429, 7
          %v431 = vsub.s32 0, %v430
          %v432 = vrot.slane %v428, %v431
          %v531 = vunpack.c.l.b16 %v330
          %v532 = vunpack.c.l.b16 %v331
          %v533 = vunpack.c.l.b16 %v332
          %v534 = vunpack.c.l.b16 %v333
          %v535 = vunpack.c.l.b16 %v334
          %v536 = vunpack.c.l.b16 %v335
          %v537 = vunpack.c.l.b16 %v336
          %v538 = vunpack.c.l.b16 %v337
          %v539 = vunpack.c.l.b16 %v338
          %v540 = vunpack.c.l.b16 %v339
          %v541 = vunpack.c.l.b16 %v340
          %v542 = vunpack.c.l.b16 %v341
          %v543 = vunpack.c.l.b16 %v342
          %v544 = vunpack.c.l.b16 %v343
          %v545 = vunpack.c.l.b16 %v344
          %v546 = vunpack.c.l.b16 %v345
          %v547 = vunpack.c.l.b16 %v346
          %v548 = vunpack.c.l.b16 %v347
          %v549 = vunpack.c.l.b16 %v348
          %v550 = vunpack.c.l.b16 %v349
          %v551 = vunpack.c.l.b16 %v350
          %v552 = vunpack.c.l.b16 %v351
          %v553 = vunpack.c.l.b16 %v352
          %v554 = vunpack.c.l.b16 %v353
          %v555 = vunpack.c.l.b16 %v354
          %v556 = vunpack.c.l.b16 %v355
          %v557 = vunpack.c.l.b16 %v356
          %v558 = vunpack.c.l.b16 %v357
          %v559 = vunpack.c.l.b16 %v358
          %v560 = vunpack.c.l.b16 %v359
          %v561 = vunpack.c.l.b16 %v360
          %v562 = vunpack.c.l.b16 %v361
          %v563 = vunpack.c.l.b16 %v362
          %v564 = vunpack.c.l.b16 %v363
          %v565 = vunpack.c.l.b16 %v364
          %v566 = vunpack.c.l.b16 %v365
          %v567 = vunpack.c.l.b16 %v366
          %v568 = vunpack.c.l.b16 %v367
          %v569 = vunpack.c.l.b16 %v368
          %v570 = vunpack.c.l.b16 %v369
          %v571 = vunpack.c.l.b16 %v370
          %v572 = vunpack.c.l.b16 %v371
          %v573 = vunpack.c.l.b16 %v372
          %v574 = vunpack.c.l.b16 %v373
          %v575 = vunpack.c.l.b16 %v374
          %v576 = vunpack.c.l.b16 %v375
          %v577 = vunpack.c.l.b16 %v376
          %v578 = vunpack.c.l.b16 %v377
          %v579 = vunpack.c.l.b16 %v378
          %v580 = vunpack.c.l.b16 %v379
          %v581 = vunpack.c.l.b16 %v380
          %v582 = vunpack.c.l.b16 %v381
          %v583 = vunpack.c.l.b16 %v382
          %v584 = vunpack.c.l.b16 %v383
          %v585 = vunpack.c.l.b16 %v384
          %v586 = vunpack.c.l.b16 %v385
          %v587 = vunpack.c.l.b16 %v386
          %v588 = vunpack.c.l.b16 %v387
          %v589 = vunpack.c.l.b16 %v388
          %v590 = vunpack.c.l.b16 %v389
          %v591 = vunpack.c.l.b16 %v390
          %v592 = vunpack.c.l.b16 %v391
          %v593 = vunpack.c.l.b16 %v392
          %v594 = vunpack.c.l.b16 %v393
          %v595 = vunpack.c.l.b16 %v394
          %v596 = vunpack.c.l.b16 %v395
          %v597 = vunpack.c.l.b16 %v396
          %v598 = vunpack.c.l.b16 %v397
          %v599 = vunpack.c.l.b16 %v398
          %v600 = vunpack.c.l.b16 %v399
          %v601 = vunpack.c.l.b16 %v400
          %v602 = vunpack.c.l.b16 %v401
          %v603 = vunpack.c.l.b16 %v402
          %v604 = vunpack.c.l.b16 %v403
          %v605 = vunpack.c.l.b16 %v404
          %v606 = vunpack.c.l.b16 %v405
          %v607 = vunpack.c.l.b16 %v406
          %v608 = vunpack.c.l.b16 %v407
          %v609 = vunpack.c.l.b16 %v408
          %v610 = vunpack.c.l.b16 %v409
          %v611 = vunpack.c.l.b16 %v410
          %v612 = vunpack.c.l.b16 %v411
          %v613 = vunpack.c.l.b16 %v412
          %v614 = vunpack.c.l.b16 %v413
          %v615 = vunpack.c.l.b16 %v414
          %v616 = vunpack.c.l.b16 %v415
          %v617 = vunpack.c.l.b16 %v416
          %v618 = vunpack.c.l.b16 %v417
          %v619 = vunpack.c.l.b16 %v418
          %v620 = vunpack.c.l.b16 %v419
          %v621 = vunpack.c.l.b16 %v420
          %v622 = vunpack.c.l.b16 %v421
          %v623 = vunpack.c.l.b16 %v422
          %v624 = vunpack.c.l.b16 %v423
          %v625 = vunpack.c.l.b16 %v424
          %v626 = vunpack.c.l.b16 %v425
          %v627 = vunpack.c.l.b16 %v426
          %v628 = vunpack.c.l.b16 %v427
          %v629 = vpack.c.b16 %v532, %v531
          %v630 = vpack.c.b16 %v534, %v533
          %v631 = vpack.c.b16 %v536, %v535
          %v632 = vpack.c.b16 %v538, %v537
          %v633 = vpack.c.b16 %v540, %v539
          %v634 = vpack.c.b16 %v542, %v541
          %v635 = vpack.c.b16 %v544, %v543
          %v636 = vpack.c.b16 %v546, %v545
          %v637 = vpack.c.b16 %v548, %v547
          %v638 = vpack.c.b16 %v550, %v549
          %v639 = vpack.c.b16 %v552, %v551
          %v640 = vpack.c.b16 %v554, %v553
          %v641 = vpack.c.b16 %v556, %v555
          %v642 = vpack.c.b16 %v558, %v557
          %v643 = vpack.c.b16 %v560, %v559
          %v644 = vpack.c.b16 %v562, %v561
          %v645 = vpack.c.b16 %v564, %v563
          %v646 = vpack.c.b16 %v566, %v565
          %v647 = vpack.c.b16 %v568, %v567
          %v648 = vpack.c.b16 %v570, %v569
          %v649 = vpack.c.b16 %v572, %v571
          %v650 = vpack.c.b16 %v574, %v573
          %v651 = vpack.c.b16 %v576, %v575
          %v652 = vpack.c.b16 %v578, %v577
          %v653 = vpack.c.b16 %v580, %v579
          %v654 = vpack.c.b16 %v582, %v581
          %v655 = vpack.c.b16 %v584, %v583
          %v656 = vpack.c.b16 %v586, %v585
          %v657 = vpack.c.b16 %v588, %v587
          %v658 = vpack.c.b16 %v590, %v589
          %v659 = vpack.c.b16 %v592, %v591
          %v660 = vpack.c.b16 %v594, %v593
          %v661 = vpack.c.b16 %v596, %v595
          %v662 = vpack.c.b16 %v598, %v597
          %v663 = vpack.c.b16 %v600, %v599
          %v664 = vpack.c.b16 %v602, %v601
          %v665 = vpack.c.b16 %v604, %v603
          %v666 = vpack.c.b16 %v606, %v605
          %v667 = vpack.c.b16 %v608, %v607
          %v668 = vpack.c.b16 %v610, %v609
          %v669 = vpack.c.b16 %v612, %v611
          %v670 = vpack.c.b16 %v614, %v613
          %v671 = vpack.c.b16 %v616, %v615
          %v672 = vpack.c.b16 %v618, %v617
          %v673 = vpack.c.b16 %v620, %v619
          %v674 = vpack.c.b16 %v622, %v621
          %v675 = vpack.c.b16 %v624, %v623
          %v676 = vpack.c.b16 %v626, %v625
          %v677 = vpack.c.b16 %v628, %v627
          %vm727 = vcmask 130048
          %v729 = vsel %vm727, %v329, 0
          %731 = vmatprep.subr.bf16.mxu0 0
          %732 = vmatpush1.bf16.msra.mxu0 %v636
          %733 = vmatprep.subr.bf16.mxu0 0
          %734 = vmatpush1.bf16.msra.mxu0 %v635
          %735 = vmatprep.subr.bf16.mxu0 0
          %736 = vmatpush1.bf16.msra.mxu0 %v634
          %737 = vmatprep.subr.bf16.mxu0 0
          %738 = vmatpush1.bf16.msra.mxu0 %v633
          %739 = vmatprep.subr.bf16.mxu0 0
          %740 = vmatpush1.bf16.msra.mxu0 %v632
          %741 = vmatprep.subr.bf16.mxu0 0
          %742 = vmatpush1.bf16.msra.mxu0 %v631
          %743 = vmatprep.subr.bf16.mxu0 0
          %744 = vmatpush1.bf16.msra.mxu0 %v630
          %745 = vmatprep.subr.bf16.mxu0 0
          %746 = vmatpush1.bf16.msra.mxu0 %v629
          %747 = vmatprep.subr.bf16.mxu0 0
          %748 = vmatpush2.bf16.msra.mxu0 %v644
          %749 = vmatprep.subr.bf16.mxu0 0
          %750 = vmatpush2.bf16.msra.mxu0 %v643
          %751 = vmatprep.subr.bf16.mxu0 0
          %752 = vmatpush2.bf16.msra.mxu0 %v642
          %753 = vmatprep.subr.bf16.mxu0 0
          %754 = vmatpush2.bf16.msra.mxu0 %v641
          %755 = vmatprep.subr.bf16.mxu0 0
          %756 = vmatpush2.bf16.msra.mxu0 %v640
          %757 = vmatprep.subr.bf16.mxu0 0
          %758 = vmatpush2.bf16.msra.mxu0 %v639
          %759 = vmatprep.subr.bf16.mxu0 0
          %760 = vmatpush2.bf16.msra.mxu0 %v638
          %761 = vmatprep.subr.bf16.mxu0 0
          %762 = vmatpush2.bf16.msra.mxu0 %v637
          %763 = vmatprep.mubr.bf16.mxu0 %v324
          %764 = vmatmul.mubr.bf16.gmra.mxu0 %v323
          %v765 = vpop.f32.mrf.mxu0
          %v766 = vadd.f32 %v432, %v765
          %v767 = vpop.f32.mrf.mxu0
          %v768 = vpop.f32.mrf.mxu0
          %v769 = vpop.f32.mrf.mxu0
          %770 = vdwg.mxu0
          %771 = vmatprep.subr.bf16.mxu0 0
          %772 = vmatpush1.bf16.msra.mxu0 %v652
          %773 = vmatprep.subr.bf16.mxu0 0
          %774 = vmatpush1.bf16.msra.mxu0 %v651
          %775 = vmatprep.subr.bf16.mxu0 0
          %776 = vmatpush1.bf16.msra.mxu0 %v650
          %777 = vmatprep.subr.bf16.mxu0 0
          %778 = vmatpush1.bf16.msra.mxu0 %v649
          %779 = vmatprep.subr.bf16.mxu0 0
          %780 = vmatpush1.bf16.msra.mxu0 %v648
          %781 = vmatprep.subr.bf16.mxu0 0
          %782 = vmatpush1.bf16.msra.mxu0 %v647
          %783 = vmatprep.subr.bf16.mxu0 0
          %784 = vmatpush1.bf16.msra.mxu0 %v646
          %785 = vmatprep.subr.bf16.mxu0 0
          %786 = vmatpush1.bf16.msra.mxu0 %v645
          %787 = vmatprep.subr.bf16.mxu0 0
          %788 = vmatpush2.bf16.msra.mxu0 %v660
          %789 = vmatprep.subr.bf16.mxu0 0
          %790 = vmatpush2.bf16.msra.mxu0 %v659
          %791 = vmatprep.subr.bf16.mxu0 0
          %792 = vmatpush2.bf16.msra.mxu0 %v658
          %793 = vmatprep.subr.bf16.mxu0 0
          %794 = vmatpush2.bf16.msra.mxu0 %v657
          %795 = vmatprep.subr.bf16.mxu0 0
          %796 = vmatpush2.bf16.msra.mxu0 %v656
          %797 = vmatprep.subr.bf16.mxu0 0
          %798 = vmatpush2.bf16.msra.mxu0 %v655
          %799 = vmatprep.subr.bf16.mxu0 0
          %800 = vmatpush2.bf16.msra.mxu0 %v654
          %801 = vmatprep.subr.bf16.mxu0 0
          %802 = vmatpush2.bf16.msra.mxu0 %v653
          %803 = vmatprep.mubr.bf16.mxu0 %v326
          %804 = vmatmul.mubr.bf16.gmra.mxu0 %v325
          %v805 = vpop.f32.mrf.mxu0
          %v806 = vadd.f32 %v766, %v805
          %v807 = vpop.f32.mrf.mxu0
          %v808 = vpop.f32.mrf.mxu0
          %v809 = vpop.f32.mrf.mxu0
          %810 = vdwg.mxu0
          %811 = vmatprep.subr.bf16.mxu0 0
          %812 = vmatpush1.bf16.msra.mxu0 %v668
          %813 = vmatprep.subr.bf16.mxu0 0
          %814 = vmatpush1.bf16.msra.mxu0 %v667
          %815 = vmatprep.subr.bf16.mxu0 0
          %816 = vmatpush1.bf16.msra.mxu0 %v666
          %817 = vmatprep.subr.bf16.mxu0 0
          %818 = vmatpush1.bf16.msra.mxu0 %v665
          %819 = vmatprep.subr.bf16.mxu0 0
          %820 = vmatpush1.bf16.msra.mxu0 %v664
          %821 = vmatprep.subr.bf16.mxu0 0
          %822 = vmatpush1.bf16.msra.mxu0 %v663
          %823 = vmatprep.subr.bf16.mxu0 0
          %824 = vmatpush1.bf16.msra.mxu0 %v662
          %825 = vmatprep.subr.bf16.mxu0 0
          %826 = vmatpush1.bf16.msra.mxu0 %v661
          %827 = vmatprep.subr.bf16.mxu0 0
          %828 = vmatpush2.bf16.msra.mxu0 %v676
          %829 = vmatprep.subr.bf16.mxu0 0
          %830 = vmatpush2.bf16.msra.mxu0 %v675
          %831 = vmatprep.subr.bf16.mxu0 0
          %832 = vmatpush2.bf16.msra.mxu0 %v674
          %833 = vmatprep.subr.bf16.mxu0 0
          %834 = vmatpush2.bf16.msra.mxu0 %v673
          %835 = vmatprep.subr.bf16.mxu0 0
          %836 = vmatpush2.bf16.msra.mxu0 %v672
          %837 = vmatprep.subr.bf16.mxu0 0
          %838 = vmatpush2.bf16.msra.mxu0 %v671
          %839 = vmatprep.subr.bf16.mxu0 0
          %840 = vmatpush2.bf16.msra.mxu0 %v670
          %841 = vmatprep.subr.bf16.mxu0 0
          %842 = vmatpush2.bf16.msra.mxu0 %v669
          %843 = vmatprep.mubr.bf16.mxu0 %v328
          %844 = vmatmul.mubr.bf16.gmra.mxu0 %v327
          %v845 = vpop.f32.mrf.mxu0
          %v846 = vadd.f32 %v806, %v845
          %v847 = vpop.f32.mrf.mxu0
          %v848 = vpop.f32.mrf.mxu0
          %v849 = vpop.f32.mrf.mxu0
          %850 = vdwg.mxu0
          %851 = vmatprep.subr.bf16.mxu0 0
          %852 = vmatpush1.bf16.msra.mxu0 0
          %853 = vmatprep.subr.bf16.mxu0 0
          %854 = vmatpush1.bf16.msra.mxu0 0
          %855 = vmatprep.subr.bf16.mxu0 0
          %856 = vmatpush1.bf16.msra.mxu0 0
          %857 = vmatprep.subr.bf16.mxu0 0
          %858 = vmatpush1.bf16.msra.mxu0 0
          %859 = vmatprep.subr.bf16.mxu0 0
          %860 = vmatpush1.bf16.msra.mxu0 0
          %861 = vmatprep.subr.bf16.mxu0 0
          %862 = vmatpush1.bf16.msra.mxu0 0
          %863 = vmatprep.subr.bf16.mxu0 0
          %864 = vmatpush1.bf16.msra.mxu0 0
          %865 = vmatprep.subr.bf16.mxu0 0
          %866 = vmatpush1.bf16.msra.mxu0 %v677
          %867 = vmatprep.subr.bf16.mxu0 0
          %868 = vmatpush2.bf16.msra.mxu0 0
          %869 = vmatprep.subr.bf16.mxu0 0
          %870 = vmatpush2.bf16.msra.mxu0 0
          %871 = vmatprep.subr.bf16.mxu0 0
          %872 = vmatpush2.bf16.msra.mxu0 0
          %873 = vmatprep.subr.bf16.mxu0 0
          %874 = vmatpush2.bf16.msra.mxu0 0
          %875 = vmatprep.subr.bf16.mxu0 0
          %876 = vmatpush2.bf16.msra.mxu0 0
          %877 = vmatprep.subr.bf16.mxu0 0
          %878 = vmatpush2.bf16.msra.mxu0 0
          %879 = vmatprep.subr.bf16.mxu0 0
          %880 = vmatpush2.bf16.msra.mxu0 0
          %881 = vmatprep.subr.bf16.mxu0 0
          %882 = vmatpush2.bf16.msra.mxu0 0
          %883 = vmatprep.mubr.bf16.mxu0 0
          %884 = vmatmul.mubr.bf16.gmra.mxu0 %v729
          %v885 = vpop.f32.mrf.mxu0
          %v886 = vadd.f32 %v846, %v885
          %v887 = vpop.f32.mrf.mxu0
          %v888 = vpop.f32.mrf.mxu0
          %v889 = vpop.f32.mrf.mxu0
          %890 = vdwg.mxu0
          %s891 = smul.u32 %s31, 8
          %s892 = scalar_lea.vmem [#allocation2], %s891
          %893 = vst [vmem:[%s892] sm:$0xff] %v886
          %v894 = vlaneseq
          %v895 = vshrl.u32 %v894, 7
          %v896 = vstv %s891
          %v897 = vadd.s32 %v895, %v896
          %vm898 = vcmp.lt.s32.totalorder %v897, 8
          %v899 = vsel %vm898, 1, 0
          %vm900 = vcmp.eq.s32.totalorder %v899, 1
          %v901 = vsel %vm900, %v886, 0.0
          %v902 = vld [vmem:[#allocation3] sm:$0x1]
          %v903 = vrot.slane %v901, 4
          %v904 = vadd.f32 %v901, %v903
          %v905 = vrot.slane %v904, 2
          %v906 = vadd.f32 %v904, %v905
          %v907 = vrot.slane %v906, 1
          %v908 = vadd.f32 %v906, %v907
          %v909 = vadd.f32 %v902, %v908
          %910 = vst [vmem:[#allocation3] sm:$0x1] %v909
          %v911 = vld [vmem:[#allocation3 + $0x1] sm:$0x1]
          %v912 = vmul.f32 %v901, %v901
          %v913 = vrot.slane %v912, 4
          %v914 = vadd.f32 %v912, %v913
          %v915 = vrot.slane %v914, 2
          %v916 = vadd.f32 %v914, %v915
          %v917 = vrot.slane %v916, 1
          %v918 = vadd.f32 %v916, %v917
          %v919 = vadd.f32 %v911, %v918
          %920 = vst [vmem:[#allocation3 + $0x1] sm:$0x1] %v919
        $region60: #{tpu_custom_call.1} parent=35 // pred_fallthru
          _
        // Predicated region
        $region61: #{tpu_custom_call.1} parent=35 // pred_check
          _
        $region62: #{tpu_custom_call.1} parent=35 // pred_check_branch
          %922 = sbr.rel (%p308) target = $region64
        $region63: #{tpu_custom_call.1} parent=35 // pred_region
          %v923 = vld [vmem:[#allocation3] sm:$0x1]
          %v924 = vmul.f32 %v923, 0.125
          %v925 = vld [vmem:[#allocation3 + $0x1] sm:$0x1]
          %v926 = vmul.f32 %v925, 0.125
          %v927 = vmul.f32 %v924, %v924
          %v928 = vsub.f32 %v926, %v927
          %v929 = vmax.f32 %v928, 0.0
          %930 = vst [vmem:[#allocation3 + $0x2] sm:$0x1] %v924
          %931 = vst [vmem:[#allocation3 + $0x3] sm:$0x1] %v929
          %932 = vst [vmem:[#allocation13] sm:$0xff] 0.0
          %933 = vst [vmem:[#allocation13] sm:$0x1] %v924
          %934 = vst [vmem:[#allocation13 + $0x1] sm:$0x1] %v929
          %v935 = vld [vmem:[#allocation9 + $0x3] sm:$0x1]
          %v936 = vmul.f32 %v935, 0.1
          %v937 = vmul.f32 %v924, 0.9
          %v938 = vadd.f32 %v936, %v937
          %939 = vst [vmem:[#allocation13 + $0x2] sm:$0x1] %v938
          %v940 = vld [vmem:[#allocation9 + $0x4] sm:$0x1]
          %v941 = vmul.f32 %v940, 0.1
          %v942 = vmul.f32 %v929, 0.9
          %v943 = vadd.f32 %v941, %v942
          %944 = vst [vmem:[#allocation13 + $0x3] sm:$0x1] %v943
        $region64: #{tpu_custom_call.1} parent=35 // pred_fallthru
          _
        %p945 = scmp.eq.s32.totalorder %s30, 1
        // Predicated region
        $region65: #{tpu_custom_call.1} parent=35 // pred_check
          %p946 = pneg %p945
        $region66: #{tpu_custom_call.1} parent=35 // pred_check_branch
          %948 = sbr.rel (%p946) target = $region68
        $region67: #{tpu_custom_call.1} parent=35 // pred_region
          %s949 = smul.u32 %s31, 8
          %s950 = scalar_lea.vmem [#allocation2], %s949
          %v951 = vld [vmem:[%s950] sm:$0xff]
          %v952 = vld [vmem:[#allocation3 + $0x2] sm:$0x1]
          %v953 = vld [vmem:[#allocation3 + $0x3] sm:$0x1]
          %v954 = vld [vmem:[#allocation9 + $0x1] sm:$0x1]
          %v955 = vld [vmem:[#allocation9 + $0x2] sm:$0x1]
          %v956 = vld [vmem:[#allocation9 + $0x5] sm:$0x1]
          %v957 = vlaneseq
          %v958 = vshrl.u32 %v957, 7
          %v959 = vsub.s32 0, %v958
          %v960 = vrot.slane %v952, %v959
          %v961 = vsub.f32 %v951, %v960
          %v962 = vadd.f32 %v953, 1e-05
          %v963 = vrsqrt.pop %v962
          %v964 = vlaneseq
          %v965 = vshrl.u32 %v964, 7
          %v966 = vsub.s32 0, %v965
          %v967 = vrot.slane %v963, %v966
          %v968 = vmul.f32 %v961, %v967
          %v969 = vlaneseq
          %v970 = vshrl.u32 %v969, 7
          %v971 = vsub.s32 0, %v970
          %v972 = vrot.slane %v954, %v971
          %v973 = vmul.f32 %v972, %v968
          %v974 = vlaneseq
          %v975 = vshrl.u32 %v974, 7
          %v976 = vsub.s32 0, %v975
          %v977 = vrot.slane %v955, %v976
          %v978 = vadd.f32 %v973, %v977
          %v979 = vmax.f32 %v978, 0.0
          %v980 = vpack.c.bf16 %v979, %v979
          %v981 = vld [vmem:[#allocation10] sm:$0xf]
          %v982 = vld [vmem:[#allocation10 + $0x4] sm:$0xf]
          %v983 = vld [vmem:[#allocation10 + $0x8] sm:$0xf]
          %v984 = vld [vmem:[#allocation10 + $0xc] sm:$0xf]
          %v985 = vld [vmem:[#allocation10 + $0x10] sm:$0xf]
          %v986 = vld [vmem:[#allocation10 + $0x14] sm:$0xf]
          %v987 = vld [vmem:[#allocation10 + $0x18] sm:$0xf]
          %v988 = vld [vmem:[#allocation10 + $0x1c] sm:$0xf]
          %v989 = vld [vmem:[#allocation10 + $0x20] sm:$0xf]
          %v990 = vld [vmem:[#allocation10 + $0x24] sm:$0xf]
          %v991 = vld [vmem:[#allocation10 + $0x28] sm:$0xf]
          %v992 = vld [vmem:[#allocation10 + $0x2c] sm:$0xf]
          %v993 = vld [vmem:[#allocation10 + $0x30] sm:$0xf]
          %v994 = vld [vmem:[#allocation10 + $0x34] sm:$0xf]
          %v995 = vld [vmem:[#allocation10 + $0x38] sm:$0xf]
          %v996 = vld [vmem:[#allocation10 + $0x3c] sm:$0xf]
          %v997 = vlaneseq
          %v998 = vshrl.u32 %v997, 7
          %v999 = vsub.s32 0, %v998
          %v1000 = vrot.slane %v956, %v999
          %v1017 = vunpack.c.l.b16 %v981
          %v1018 = vunpack.c.l.b16 %v982
          %v1019 = vunpack.c.l.b16 %v983
          %v1020 = vunpack.c.l.b16 %v984
          %v1021 = vunpack.c.l.b16 %v985
          %v1022 = vunpack.c.l.b16 %v986
          %v1023 = vunpack.c.l.b16 %v987
          %v1024 = vunpack.c.l.b16 %v988
          %v1025 = vunpack.c.l.b16 %v989
          %v1026 = vunpack.c.l.b16 %v990
          %v1027 = vunpack.c.l.b16 %v991
          %v1028 = vunpack.c.l.b16 %v992
          %v1029 = vunpack.c.l.b16 %v993
          %v1030 = vunpack.c.l.b16 %v994
          %v1031 = vunpack.c.l.b16 %v995
          %v1032 = vunpack.c.l.b16 %v996
          %v1033 = vpack.c.b16 %v1018, %v1017
          %v1034 = vpack.c.b16 %v1020, %v1019
          %v1035 = vpack.c.b16 %v1022, %v1021
          %v1036 = vpack.c.b16 %v1024, %v1023
          %v1037 = vpack.c.b16 %v1026, %v1025
          %v1038 = vpack.c.b16 %v1028, %v1027
          %v1039 = vpack.c.b16 %v1030, %v1029
          %v1040 = vpack.c.b16 %v1032, %v1031
          %1049 = vmatprep.subr.bf16.mxu0 0
          %1050 = vmatpush1.bf16.msra.mxu0 %v1040
          %1051 = vmatprep.subr.bf16.mxu0 0
          %1052 = vmatpush1.bf16.msra.mxu0 %v1039
          %1053 = vmatprep.subr.bf16.mxu0 0
          %1054 = vmatpush1.bf16.msra.mxu0 %v1038
          %1055 = vmatprep.subr.bf16.mxu0 0
          %1056 = vmatpush1.bf16.msra.mxu0 %v1037
          %1057 = vmatprep.subr.bf16.mxu0 0
          %1058 = vmatpush1.bf16.msra.mxu0 %v1036
          %1059 = vmatprep.subr.bf16.mxu0 0
          %1060 = vmatpush1.bf16.msra.mxu0 %v1035
          %1061 = vmatprep.subr.bf16.mxu0 0
          %1062 = vmatpush1.bf16.msra.mxu0 %v1034
          %1063 = vmatprep.subr.bf16.mxu0 0
          %1064 = vmatpush1.bf16.msra.mxu0 %v1033
          %1065 = vmatprep.subr.bf16.mxu0 0
          %1066 = vmatpush2.bf16.msra.mxu0 0
          %1067 = vmatprep.subr.bf16.mxu0 0
          %1068 = vmatpush2.bf16.msra.mxu0 0
          %1069 = vmatprep.subr.bf16.mxu0 0
          %1070 = vmatpush2.bf16.msra.mxu0 0
          %1071 = vmatprep.subr.bf16.mxu0 0
          %1072 = vmatpush2.bf16.msra.mxu0 0
          %1073 = vmatprep.subr.bf16.mxu0 0
          %1074 = vmatpush2.bf16.msra.mxu0 0
          %1075 = vmatprep.subr.bf16.mxu0 0
          %1076 = vmatpush2.bf16.msra.mxu0 0
          %1077 = vmatprep.subr.bf16.mxu0 0
          %1078 = vmatpush2.bf16.msra.mxu0 0
          %1079 = vmatprep.subr.bf16.mxu0 0
          %1080 = vmatpush2.bf16.msra.mxu0 0
          %1081 = vmatprep.mubr.bf16.mxu0 0
          %1082 = vmatmul.mubr.bf16.gmra.mxu0 %v980
          %v1083 = vpop.f32.mrf.mxu0
          %v1084 = vadd.f32 %v1000, %v1083
          %v1085 = vpop.f32.mrf.mxu0
          %v1086 = vpop.f32.mrf.mxu0
          %v1087 = vpop.f32.mrf.mxu0
          %1088 = vdwg.mxu0
          %1089 = vst [vmem:[%s299] sm:$0xff] %v1084
        $region68: #{tpu_custom_call.1} parent=35 // pred_fallthru
          _
        %s1090 = sand.u32 %s141, 1
        %s1091 = scalar_lea.sflag [#allocation6], %s1090
        %s1092 = sand.u32 %s141, 1
        %s1093 = smul.addr %s1092, 8
        %s1094 = scalar_lea.vmem [#allocation12], %s1093
        // Predicated region
        $region69: #{tpu_custom_call.1} parent=35 // pred_check
          %p1095 = pneg %p151
        $region70: #{tpu_custom_call.1} parent=35 // pred_check_branch
          %1097 = sbr.rel (%p1095) target = $region72
        $region71: #{tpu_custom_call.1} parent=35 // pred_region
          %s1098 = smul.u32 %s31, %s30
          %s1100 = ssub.s32 128, 128
          %1101 = vsyncadd %s1091, %s1100
          %s1102 = smul.addr %s1098, 128
          %s1103 = scalar_lea.hbm %s4, %s1102
          %s1105 = sshll.u32 %s1094, 4
          %s1106 = int_to_ptr.vmem [resolvable:$true] %s1105
          %1108 = dma.vmem_to_hbm [thread:$0]  %s1106, 128, %s1103, %s1091
        $region72: #{tpu_custom_call.1} parent=35 // pred_fallthru
          _
        // Predicated region
        $region73: #{tpu_custom_call.1} parent=35 // pred_check
          %p1109 = pneg %p172
        $region74: #{tpu_custom_call.1} parent=35 // pred_check_branch
          %1111 = sbr.rel (%p1109) target = $region76
        $region75: #{tpu_custom_call.1} parent=35 // pred_region
          %s1113 = ssub.s32 128, 128
          %1114 = vsyncadd [#allocation14], %s1113
          %s1116 = sshll.u32 [#allocation13], 4
          %s1117 = int_to_ptr.vmem [resolvable:$true] %s1116
          %1119 = dma.vmem_to_hbm [thread:$0]  %s1117, 128, %s5, [#allocation14]
        $region76: #{tpu_custom_call.1} parent=35 // pred_fallthru
          _
        // Predicated region
        $region77: #{tpu_custom_call.1} parent=35 // pred_check
          %p1120 = pneg %p172
        $region78: #{tpu_custom_call.1} parent=35 // pred_check_branch
          %1122 = sbr.rel (%p1120) target = $region80
        $region79: #{tpu_custom_call.1} parent=35 // pred_region
          %1123 = dma.done [#allocation14], 128
        $region80: #{tpu_custom_call.1} parent=35 // pred_fallthru
          _
      $region36: #{tpu_custom_call.1} parent=5 // pred_fallthru
        _
      %p1124 = scmp.le.s32.totalorder 2, %s21
      // Predicated region
      $region81: #{tpu_custom_call.1} parent=5 // pred_check
        %p1125 = pneg %p1124
      $region82: #{tpu_custom_call.1} parent=5 // pred_check_branch
        %1127 = sbr.rel (%p1125) target = $region84
      $region83: #{tpu_custom_call.1} parent=5 // pred_region
        %s1128 = ssub.s32 %s21, 2
        // Predicated region
        $region85: #{tpu_custom_call.1} parent=83 // pred_check
          %p1129 = pneg %p157
        $region86: #{tpu_custom_call.1} parent=83 // pred_check_branch
          %1131 = sbr.rel (%p1129) target = $region88
        $region87: #{tpu_custom_call.1} parent=83 // pred_region
          %s1132 = sand.u32 %s142, 1
          %s1133 = scalar_lea.sflag [#allocation6], %s1132
          %s1134 = sand.u32 %s142, 1
          %s1135 = smul.addr %s1134, 8
          %s1136 = scalar_lea.vmem [#allocation12], %s1135
          %1137 = dma.done %s1133, 128
        $region88: #{tpu_custom_call.1} parent=83 // pred_fallthru
          _
      $region84: #{tpu_custom_call.1} parent=5 // pred_fallthru
        _
    $region6: #{tpu_custom_call.1} parent=1 // loop_footer
      %s25 = sadd.s32 1, %s21
    $region7: #{tpu_custom_call.1} parent=1 // loop_footer_branch
      %20 = sbr.rel target = $region3
    $region8: #{tpu_custom_call.1} parent=1 // loop_exit
      _
    %1138 = vsyncpa [#allocation5], 1
    %s1139 = scalar_lea.sflag [#allocation5], 1
    %1140 = vsyncpa %s1139, 1
    %1141 = vsyncpa [#allocation8], 1
    %1142 = vsyncpa [#allocation11], 1
    %1143 = vsyncpa [#allocation6], 1
    %s1144 = scalar_lea.sflag [#allocation6], 1
    %1145 = vsyncpa %s1144, 1
    %1146 = vsyncpa [#allocation14], 1

</llo_original>
